<compile_context>
chip_gen: v7x
topology: tpu7x:2x2x1
jax: 0.10.0
libtpu: 0.0.40
codegen_flags: <defaults>
</compile_context>

<pallas_src>
import numpy as np
import jax
import jax.numpy as jnp
from jax.experimental import pallas as pl
from jax.experimental.pallas import tpu as pltpu

EPS = 1e-5

# dtype fed to the MXU (activations/weights at the dot boundary).  bf16 per the
# perf review (v5e/v6e/v7x); accumulation is always f32.  Set to jnp.float32
# for bit-faithful f32 convs (then the kernel matches the pure-f32 reference
# within 1e-3).
MXU_DTYPE = jnp.bfloat16


# --------------------------------------------------------------------------
# Host-side weight repacking (weights only, done once per parameter set).
# --------------------------------------------------------------------------
def _banded_conv_weight(w_oihw, W):
    """(Cout, Cin, 3, 3) PyTorch conv weight -> (3, W*Cin, W*Cout) banded mats.

    R[dy][iw*Cin+ci, ow*Cout+co] = w[co, ci, dy, dx] with iw = ow + dx - 1;
    out-of-range iw (the SAME horizontal padding) is simply omitted (zero).
    """
    w = np.asarray(w_oihw, np.float32)
    Cout, Cin = w.shape[0], w.shape[1]
    r = np.zeros((3, W * Cin, W * Cout), np.float32)
    for dy in range(3):
        for ow in range(W):
            for dx in range(3):
                iw = ow + dx - 1
                if 0 <= iw < W:
                    r[dy, iw * Cin:(iw + 1) * Cin,
                      ow * Cout:(ow + 1) * Cout] = w[:, :, dy, dx].T
    return r


def _blockdiag_1x1(wsc_oi, W):
    """(Cout, Cin) 1x1-conv weight -> block-diagonal (W*Cin, W*Cout) matrix."""
    wsc = np.asarray(wsc_oi, np.float32)
    Cout, Cin = wsc.shape
    b = np.zeros((W * Cin, W * Cout), np.float32)
    blk = wsc.T
    for w in range(W):
        b[w * Cin:(w + 1) * Cin, w * Cout:(w + 1) * Cout] = blk
    return b


def _channel_projector(C, W):
    """(W*C, W*C) 0/1 matrix with P[w*C+c, w'*C+c'] = (c == c')."""
    return np.tile(np.eye(C, dtype=np.float32), (W, W))


# --------------------------------------------------------------------------
# Fused kernel (everything in the lane-folded (N*H, W*C) layout, no scratch).
# --------------------------------------------------------------------------
def _make_kernel(N, H, W, Cin, Cout, same_channels, mxu_dtype):
    NH, WCi, WCo = N * H, W * Cin, W * Cout
    inv_count = 1.0 / float(N * H * W)

    def kernel(x_ref, g1_ref, b1_ref, pin_ref, r1_ref, c1_ref,
               g2_ref, b2_ref, pout_ref, r2_ref, c2_ref, *rest):
        if same_channels:
            (o_ref,) = rest
            wsc_ref = csc_ref = None
        else:
            wsc_ref, csc_ref, o_ref = rest

        x = x_ref[...].astype(jnp.float32)                    # (NH, W*Cin)

        # Boundary-aware row-shift matrices (shared by both convs).  up/down
        # vertical conv taps become tiny (NH, NH) matmuls; the zero SAME-pad
        # rows at image borders are folded into the 0/1 entries, so no pad
        # scratch, no unaligned slice/reshape copies, no masks.
        rows = jax.lax.broadcasted_iota(jnp.int32, (NH, NH), 0)
        cols = jax.lax.broadcasted_iota(jnp.int32, (NH, NH), 1)
        h_img = rows % H
        s_up = jnp.where((cols == rows - 1) & (h_img != 0),
                         1.0, 0.0).astype(mxu_dtype)          # row r <- a[r-1]
        s_dn = jnp.where((cols == rows + 1) & (h_img != H - 1),
                         1.0, 0.0).astype(mxu_dtype)          # row r <- a[r+1]

        def bn_relu(v, proj_ref, g_ref, b_ref):
            # Per-channel batch stats in the folded layout: reduce the rows
            # first (sublane reduce), then project across the W lane-groups
            # with a tiny (1, W*C) x (W*C, W*C) 0/1 matmul (exact; ~32x less
            # MXU work than projecting the full slab).  Centered (two-pass)
            # variance; stats kept in f32.
            P = proj_ref[...]
            rsum = jnp.sum(v, axis=0, keepdims=True)                   # (1, WC)
            m = jnp.dot(rsum, P, preferred_element_type=jnp.float32) * inv_count
            vc = v - m
            rsq = jnp.sum(vc * vc, axis=0, keepdims=True)              # (1, WC)
            var = jnp.dot(rsq, P, preferred_element_type=jnp.float32) * inv_count
            scale = g_ref[...] * jax.lax.rsqrt(var + EPS)              # (1, WC)
            return jnp.maximum(vc * scale + b_ref[...], 0.0)

        def conv3x3(a, r_ref, c_ref):
            # 3x3 conv = 3 banded matmuls (one per vertical tap), operands cast
            # to MXU_DTYPE at the dot boundary, f32 accumulation kept in the
            # `acc = acc + dot(...)` form (MRB-friendly on v7x).
            am = a.astype(mxu_dtype)
            up = jnp.dot(s_up, am,
                         preferred_element_type=jnp.float32).astype(mxu_dtype)
            dn = jnp.dot(s_dn, am,
                         preferred_element_type=jnp.float32).astype(mxu_dtype)
            acc = jnp.dot(up, r_ref[0], preferred_element_type=jnp.float32)
            acc = acc + jnp.dot(am, r_ref[1], preferred_element_type=jnp.float32)
            acc = acc + jnp.dot(dn, r_ref[2], preferred_element_type=jnp.float32)
            return acc + c_ref[...]

        # BN1 -> ReLU -> Conv3x3
        a1 = bn_relu(x, pin_ref, g1_ref, b1_ref)
        h = conv3x3(a1, r1_ref, c1_ref)                       # (NH, W*Cout)

        # BN2 -> ReLU -> Conv3x3
        a2 = bn_relu(h, pout_ref, g2_ref, b2_ref)
        y = conv3x3(a2, r2_ref, c2_ref)                       # (NH, W*Cout)

        # Shortcut (gated at trace time).
        if same_channels:
            sc = x                                            # nn.Identity()
        else:
            sc = jnp.dot(x.astype(mxu_dtype), wsc_ref[...],
                         preferred_element_type=jnp.float32) + csc_ref[...]

        o_ref[...] = (y + sc).astype(o_ref.dtype)             # full-lane store

    return kernel


# --------------------------------------------------------------------------
# Wrapper: NHWC input, PyTorch-layout parameters.
# --------------------------------------------------------------------------
def residual_block(x_nhwc, params):
    N, H, W, Cin = x_nhwc.shape
    Cout = params["w1"].shape[0]
    same_channels = (Cin == Cout)
    NH, WCi, WCo = N * H, W * Cin, W * Cout

    x_f = x_nhwc.reshape(NH, WCi).astype(jnp.float32)

    def tile_c(v, width):                    # (C,) -> (1, W*C), channel-fastest
        return jnp.tile(jnp.asarray(v, jnp.float32).reshape(1, -1), (1, width))

    pin = jnp.asarray(_channel_projector(Cin, W))
    pout = jnp.asarray(_channel_projector(Cout, W))
    r1 = jnp.asarray(_banded_conv_weight(params["w1"], W), dtype=MXU_DTYPE)
    r2 = jnp.asarray(_banded_conv_weight(params["w2"], W), dtype=MXU_DTYPE)

    inputs = [x_f,
              tile_c(params["g1"], W), tile_c(params["b1"], W), pin, r1,
              tile_c(params["c1"], W),
              tile_c(params["g2"], W), tile_c(params["b2"], W), pout, r2,
              tile_c(params["c2"], W)]
    in_specs = [pl.BlockSpec((NH, WCi), lambda i: (0, 0)),
                pl.BlockSpec((1, WCi), lambda i: (0, 0)),
                pl.BlockSpec((1, WCi), lambda i: (0, 0)),
                pl.BlockSpec((WCi, WCi), lambda i: (0, 0)),
                pl.BlockSpec((3, WCi, WCo), lambda i: (0, 0, 0)),
                pl.BlockSpec((1, WCo), lambda i: (0, 0)),
                pl.BlockSpec((1, WCo), lambda i: (0, 0)),
                pl.BlockSpec((1, WCo), lambda i: (0, 0)),
                pl.BlockSpec((WCo, WCo), lambda i: (0, 0)),
                pl.BlockSpec((3, WCo, WCo), lambda i: (0, 0, 0)),
                pl.BlockSpec((1, WCo), lambda i: (0, 0))]
    if not same_channels:
        inputs += [jnp.asarray(_blockdiag_1x1(params["wsc"][:, :, 0, 0], W),
                               dtype=MXU_DTYPE),
                   tile_c(params["csc"], W)]
        in_specs += [pl.BlockSpec((WCi, WCo), lambda i: (0, 0)),
                     pl.BlockSpec((1, WCo), lambda i: (0, 0))]

    out_f = pl.pallas_call(
        _make_kernel(N, H, W, Cin, Cout, same_channels, MXU_DTYPE),
        out_shape=jax.ShapeDtypeStruct((NH, WCo), x_nhwc.dtype),
        grid_spec=pltpu.PrefetchScalarGridSpec(
            num_scalar_prefetch=0,
            grid=(1,),
            in_specs=in_specs,
            out_specs=pl.BlockSpec((NH, WCo), lambda i: (0, 0))),
        compiler_params=pltpu.CompilerParams(
            dimension_semantics=("arbitrary",)),
    )(*inputs)

    return out_f.reshape(N, H, W, Cout)


# --------------------------------------------------------------------------
# Pure-JAX NHWC reference mirroring the PyTorch forward (training-mode BN).
# `mxu_dtype` applies the same MXU-boundary rounding as the kernel so the
# comparison stays tight; pass jnp.float32 for the exact f32 reference.
# --------------------------------------------------------------------------
def residual_block_ref(x, p, mxu_dtype=jnp.float32):
    def bn_relu(v, g, b):
        m = jnp.mean(v, axis=(0, 1, 2), keepdims=True)
        var = jnp.mean(jnp.square(v - m), axis=(0, 1, 2), keepdims=True)
        scale = g * jax.lax.rsqrt(var + EPS)
        return jnp.maximum((v - m) * scale + b, 0.0)

    dn = ("NHWC", "HWIO", "NHWC")

    def conv(a, w_oihw, c):
        w = jnp.transpose(w_oihw, (2, 3, 1, 0)).astype(mxu_dtype)
        out = jax.lax.conv_general_dilated(
            a.astype(mxu_dtype), w, (1, 1), "SAME", dimension_numbers=dn,
            preferred_element_type=jnp.float32)
        return out + c

    a1 = bn_relu(x, p["g1"], p["b1"])
    h = conv(a1, p["w1"], p["c1"])
    a2 = bn_relu(h, p["g2"], p["b2"])
    y = conv(a2, p["w2"], p["c2"])
    if "wsc" in p:
        sc = jnp.einsum("nhwc,dc->nhwd", x.astype(mxu_dtype),
                        p["wsc"][:, :, 0, 0].astype(mxu_dtype),
                        preferred_element_type=jnp.float32) + p["csc"]
    else:
        sc = x
    return sc + y


if __name__ == "__main__":
    # ResidualBlock(in_channels=4, out_channels=8) on a (2, 4, 16, 16) input.
    N, Cin, Cout, H, W = 2, 4, 8, 16, 16

    key = jax.random.PRNGKey(0)
    ks = jax.random.split(key, 11)

    x_nchw = jax.random.normal(ks[0], (N, Cin, H, W), jnp.float32)  # PyTorch layout
    x = jnp.transpose(x_nchw, (0, 2, 3, 1))                         # -> NHWC

    params = {
        "g1": 1.0 + 0.1 * jax.random.normal(ks[1], (Cin,), jnp.float32),
        "b1": 0.1 * jax.random.normal(ks[2], (Cin,), jnp.float32),
        "w1": jax.random.normal(ks[3], (Cout, Cin, 3, 3), jnp.float32)
              / (3.0 * float(Cin) ** 0.5),
        "c1": 0.1 * jax.random.normal(ks[4], (Cout,), jnp.float32),
        "g2": 1.0 + 0.1 * jax.random.normal(ks[5], (Cout,), jnp.float32),
        "b2": 0.1 * jax.random.normal(ks[6], (Cout,), jnp.float32),
        "w2": jax.random.normal(ks[7], (Cout, Cout, 3, 3), jnp.float32)
              / (3.0 * float(Cout) ** 0.5),
        "c2": 0.1 * jax.random.normal(ks[8], (Cout,), jnp.float32),
    }
    if Cin != Cout:  # nn.Conv2d(in, out, kernel_size=1) shortcut
        params["wsc"] = jax.random.normal(ks[9], (Cout, Cin, 1, 1), jnp.float32) \
                        / float(Cin) ** 0.5
        params["csc"] = 0.1 * jax.random.normal(ks[10], (Cout,), jnp.float32)

    out = jax.block_until_ready(residual_block(x, params))   # NHWC

    # Compare against a reference with the same MXU-boundary rounding (tight
    # tolerance); with MXU_DTYPE=jnp.float32 this is the exact f32 reference.
    ref = residual_block_ref(x, params, mxu_dtype=MXU_DTYPE)
    tol = 1e-3 if MXU_DTYPE == jnp.float32 else 5e-3
    err = float(jnp.max(jnp.abs(out - ref)))
    assert jnp.allclose(out, ref, atol=tol, rtol=tol), f"max abs err = {err}"

    out_nchw = jnp.transpose(out, (0, 3, 1, 2))               # back to PyTorch NCHW
    print("KERNEL_OK")
</pallas_src>

<mosaic_0001>
module attributes {stable_mosaic.version = 11 : i64} {
  func.func @kernel(%arg0: i32, %arg1: memref<32x64xf32, #tpu.memory_space<vmem>>, %arg2: memref<1x64xf32, #tpu.memory_space<vmem>>, %arg3: memref<1x64xf32, #tpu.memory_space<vmem>>, %arg4: memref<64x64xf32, #tpu.memory_space<vmem>>, %arg5: memref<3x64x128xbf16, #tpu.memory_space<vmem>>, %arg6: memref<1x128xf32, #tpu.memory_space<vmem>>, %arg7: memref<1x128xf32, #tpu.memory_space<vmem>>, %arg8: memref<1x128xf32, #tpu.memory_space<vmem>>, %arg9: memref<128x128xf32, #tpu.memory_space<vmem>>, %arg10: memref<3x128x128xbf16, #tpu.memory_space<vmem>>, %arg11: memref<1x128xf32, #tpu.memory_space<vmem>>, %arg12: memref<64x128xbf16, #tpu.memory_space<vmem>>, %arg13: memref<1x128xf32, #tpu.memory_space<vmem>>, %arg14: memref<32x128xf32, #tpu.memory_space<vmem>>) attributes {dimension_semantics = [#tpu.dimension_semantics<arbitrary>], iteration_bounds = array<i64: 1>, scalar_prefetch = 0 : i64, scratch_operands = 0 : i64, tpu.core_type = #tpu.core_type<tc>, window_params = [{pipeline_mode = #tpu.pipeline_mode<synchronous>, transform_indices = @transform_0, window_bounds = array<i64: 32, 64>}, {pipeline_mode = #tpu.pipeline_mode<synchronous>, transform_indices = @transform_1, window_bounds = array<i64: 1, 64>}, {pipeline_mode = #tpu.pipeline_mode<synchronous>, transform_indices = @transform_2, window_bounds = array<i64: 1, 64>}, {pipeline_mode = #tpu.pipeline_mode<synchronous>, transform_indices = @transform_3, window_bounds = array<i64: 64, 64>}, {pipeline_mode = #tpu.pipeline_mode<synchronous>, transform_indices = @transform_4, window_bounds = array<i64: 3, 64, 128>}, {pipeline_mode = #tpu.pipeline_mode<synchronous>, transform_indices = @transform_5, window_bounds = array<i64: 1, 128>}, {pipeline_mode = #tpu.pipeline_mode<synchronous>, transform_indices = @transform_6, window_bounds = array<i64: 1, 128>}, {pipeline_mode = #tpu.pipeline_mode<synchronous>, transform_indices = @transform_7, window_bounds = array<i64: 1, 128>}, {pipeline_mode = #tpu.pipeline_mode<synchronous>, transform_indices = @transform_8, window_bounds = array<i64: 128, 128>}, {pipeline_mode = #tpu.pipeline_mode<synchronous>, transform_indices = @transform_9, window_bounds = array<i64: 3, 128, 128>}, {pipeline_mode = #tpu.pipeline_mode<synchronous>, transform_indices = @transform_10, window_bounds = array<i64: 1, 128>}, {pipeline_mode = #tpu.pipeline_mode<synchronous>, transform_indices = @transform_11, window_bounds = array<i64: 64, 128>}, {pipeline_mode = #tpu.pipeline_mode<synchronous>, transform_indices = @transform_12, window_bounds = array<i64: 1, 128>}, {pipeline_mode = #tpu.pipeline_mode<synchronous>, transform_indices = @transform_13, window_bounds = array<i64: 32, 128>}]} {
    %c0 = arith.constant 0 : index
    %c0_0 = arith.constant 0 : index
    %0 = vector.load %arg1[%c0, %c0_0] : memref<32x64xf32, #tpu.memory_space<vmem>>, vector<32x64xf32>
    %1 = tpu.iota {dimensions = array<i32: 0>} : vector<32x32xi32>
    %2 = tpu.iota {dimensions = array<i32: 1>} : vector<32x32xi32>
    %c16_i32 = arith.constant 16 : i32
    %c0_i32 = arith.constant 0 : i32
    %3 = arith.cmpi eq, %c16_i32, %c0_i32 : i32
    %c1_i32 = arith.constant 1 : i32
    %4 = arith.select %3, %c1_i32, %c16_i32 : i32
    %5 = vector.broadcast %4 : i32 to vector<32x32xi32>
    %6 = arith.remsi %1, %5 : vector<32x32xi32>
    %c0_i32_1 = arith.constant 0 : i32
    %7 = vector.broadcast %c0_i32_1 : i32 to vector<32x32xi32>
    %8 = arith.cmpi ne, %6, %7 : vector<32x32xi32>
    %c0_i32_2 = arith.constant 0 : i32
    %9 = vector.broadcast %c0_i32_2 : i32 to vector<32x32xi32>
    %10 = arith.cmpi slt, %6, %9 : vector<32x32xi32>
    %c0_i32_3 = arith.constant 0 : i32
    %11 = arith.cmpi slt, %4, %c0_i32_3 : i32
    %12 = vector.broadcast %11 : i1 to vector<32x32xi1>
    %13 = vector.broadcast %12 : vector<32x32xi1> to vector<32x32xi1>
    %14 = arith.xori %10, %13 : vector<32x32xi1>
    %15 = arith.andi %14, %8 : vector<32x32xi1>
    %16 = vector.broadcast %4 : i32 to vector<32x32xi32>
    %17 = arith.addi %6, %16 : vector<32x32xi32>
    %18 = arith.select %15, %17, %6 : vector<32x32xi1>, vector<32x32xi32>
    %c1_i32_4 = arith.constant 1 : i32
    %19 = vector.broadcast %c1_i32_4 : i32 to vector<32x32xi32>
    %20 = arith.subi %1, %19 : vector<32x32xi32>
    %21 = arith.cmpi eq, %2, %20 : vector<32x32xi32>
    %c0_i32_5 = arith.constant 0 : i32
    %22 = vector.broadcast %c0_i32_5 : i32 to vector<32x32xi32>
    %23 = arith.cmpi ne, %18, %22 : vector<32x32xi32>
    %24 = arith.andi %21, %23 : vector<32x32xi1>
    %cst = arith.constant 1.000000e+00 : f32
    %cst_6 = arith.constant 0.000000e+00 : f32
    %25 = vector.broadcast %cst : f32 to vector<32x32xf32>
    %26 = vector.broadcast %cst_6 : f32 to vector<32x32xf32>
    %27 = arith.select %24, %25, %26 : vector<32x32xi1>, vector<32x32xf32>
    %28 = arith.truncf %27 : vector<32x32xf32> to vector<32x32xbf16>
    %c1_i32_7 = arith.constant 1 : i32
    %29 = vector.broadcast %c1_i32_7 : i32 to vector<32x32xi32>
    %30 = arith.addi %1, %29 : vector<32x32xi32>
    %31 = arith.cmpi eq, %2, %30 : vector<32x32xi32>
    %c15_i32 = arith.constant 15 : i32
    %32 = vector.broadcast %c15_i32 : i32 to vector<32x32xi32>
    %33 = arith.cmpi ne, %18, %32 : vector<32x32xi32>
    %34 = arith.andi %31, %33 : vector<32x32xi1>
    %cst_8 = arith.constant 1.000000e+00 : f32
    %cst_9 = arith.constant 0.000000e+00 : f32
    %35 = vector.broadcast %cst_8 : f32 to vector<32x32xf32>
    %36 = vector.broadcast %cst_9 : f32 to vector<32x32xf32>
    %37 = arith.select %34, %35, %36 : vector<32x32xi1>, vector<32x32xf32>
    %38 = arith.truncf %37 : vector<32x32xf32> to vector<32x32xbf16>
    %c0_10 = arith.constant 0 : index
    %c0_11 = arith.constant 0 : index
    %39 = vector.load %arg4[%c0_10, %c0_11] : memref<64x64xf32, #tpu.memory_space<vmem>>, vector<64x64xf32>
    %cst_12 = arith.constant dense<0.000000e+00> : vector<64xf32>
    %40 = vector.multi_reduction <add>, %0, %cst_12 [0] : vector<32x64xf32> to vector<64xf32>
    %41 = vector.shape_cast %40 : vector<64xf32> to vector<1x64xf32>
    %cst_13 = arith.constant dense<0.000000e+00> : vector<1x64xf32>
    %42 = tpu.matmul %41, %39, %cst_13 {dimension_numbers = #tpu.dot_dimension_numbers<[1], [0], [0], [1], [0, 0, 1, 1], [], []>} : vector<1x64xf32>, vector<64x64xf32>, vector<1x64xf32> -> vector<1x64xf32>
    %cst_14 = arith.constant 0.001953125 : f32
    %43 = vector.broadcast %cst_14 : f32 to vector<1x64xf32>
    %44 = arith.mulf %42, %43 : vector<1x64xf32>
    %45 = vector.broadcast %44 : vector<1x64xf32> to vector<32x64xf32>
    %46 = arith.subf %0, %45 : vector<32x64xf32>
    %47 = arith.mulf %46, %46 : vector<32x64xf32>
    %cst_15 = arith.constant dense<0.000000e+00> : vector<64xf32>
    %48 = vector.multi_reduction <add>, %47, %cst_15 [0] : vector<32x64xf32> to vector<64xf32>
    %49 = vector.shape_cast %48 : vector<64xf32> to vector<1x64xf32>
    %cst_16 = arith.constant dense<0.000000e+00> : vector<1x64xf32>
    %50 = tpu.matmul %49, %39, %cst_16 {dimension_numbers = #tpu.dot_dimension_numbers<[1], [0], [0], [1], [0, 0, 1, 1], [], []>} : vector<1x64xf32>, vector<64x64xf32>, vector<1x64xf32> -> vector<1x64xf32>
    %cst_17 = arith.constant 0.001953125 : f32
    %51 = vector.broadcast %cst_17 : f32 to vector<1x64xf32>
    %52 = arith.mulf %50, %51 : vector<1x64xf32>
    %c0_18 = arith.constant 0 : index
    %c0_19 = arith.constant 0 : index
    %53 = vector.load %arg2[%c0_18, %c0_19] : memref<1x64xf32, #tpu.memory_space<vmem>>, vector<1x64xf32>
    %cst_20 = arith.constant 9.99999974E-6 : f32
    %54 = vector.broadcast %cst_20 : f32 to vector<1x64xf32>
    %55 = arith.addf %52, %54 : vector<1x64xf32>
    %56 = math.rsqrt %55 : vector<1x64xf32>
    %57 = arith.mulf %53, %56 : vector<1x64xf32>
    %58 = vector.broadcast %57 : vector<1x64xf32> to vector<32x64xf32>
    %59 = arith.mulf %46, %58 : vector<32x64xf32>
    %c0_21 = arith.constant 0 : index
    %c0_22 = arith.constant 0 : index
    %60 = vector.load %arg3[%c0_21, %c0_22] : memref<1x64xf32, #tpu.memory_space<vmem>>, vector<1x64xf32>
    %61 = vector.broadcast %60 : vector<1x64xf32> to vector<32x64xf32>
    %62 = arith.addf %59, %61 : vector<32x64xf32>
    %cst_23 = arith.constant 0.000000e+00 : f32
    %63 = vector.broadcast %cst_23 : f32 to vector<32x64xf32>
    %64 = arith.maximumf %62, %63 : vector<32x64xf32>
    %65 = arith.truncf %64 : vector<32x64xf32> to vector<32x64xbf16>
    %cst_24 = arith.constant dense<0.000000e+00> : vector<32x64xf32>
    %66 = tpu.matmul %28, %65, %cst_24 {dimension_numbers = #tpu.dot_dimension_numbers<[1], [0], [0], [1], [0, 0, 1, 1], [], []>} : vector<32x32xbf16>, vector<32x64xbf16>, vector<32x64xf32> -> vector<32x64xf32>
    %67 = arith.truncf %66 : vector<32x64xf32> to vector<32x64xbf16>
    %cst_25 = arith.constant dense<0.000000e+00> : vector<32x64xf32>
    %68 = tpu.matmul %38, %65, %cst_25 {dimension_numbers = #tpu.dot_dimension_numbers<[1], [0], [0], [1], [0, 0, 1, 1], [], []>} : vector<32x32xbf16>, vector<32x64xbf16>, vector<32x64xf32> -> vector<32x64xf32>
    %69 = arith.truncf %68 : vector<32x64xf32> to vector<32x64xbf16>
    %c0_26 = arith.constant 0 : index
    %c0_27 = arith.constant 0 : index
    %c0_28 = arith.constant 0 : index
    %70 = vector.load %arg5[%c0_26, %c0_27, %c0_28] : memref<3x64x128xbf16, #tpu.memory_space<vmem>>, vector<1x64x128xbf16>
    %71 = vector.shape_cast %70 : vector<1x64x128xbf16> to vector<64x128xbf16>
    %cst_29 = arith.constant dense<0.000000e+00> : vector<32x128xf32>
    %72 = tpu.matmul %67, %71, %cst_29 {dimension_numbers = #tpu.dot_dimension_numbers<[1], [0], [0], [1], [0, 0, 1, 1], [], []>} : vector<32x64xbf16>, vector<64x128xbf16>, vector<32x128xf32> -> vector<32x128xf32>
    %c1 = arith.constant 1 : index
    %c0_30 = arith.constant 0 : index
    %c0_31 = arith.constant 0 : index
    %73 = vector.load %arg5[%c1, %c0_30, %c0_31] : memref<3x64x128xbf16, #tpu.memory_space<vmem>>, vector<1x64x128xbf16>
    %74 = vector.shape_cast %73 : vector<1x64x128xbf16> to vector<64x128xbf16>
    %cst_32 = arith.constant dense<0.000000e+00> : vector<32x128xf32>
    %75 = tpu.matmul %65, %74, %cst_32 {dimension_numbers = #tpu.dot_dimension_numbers<[1], [0], [0], [1], [0, 0, 1, 1], [], []>} : vector<32x64xbf16>, vector<64x128xbf16>, vector<32x128xf32> -> vector<32x128xf32>
    %76 = arith.addf %72, %75 : vector<32x128xf32>
    %c2 = arith.constant 2 : index
    %c0_33 = arith.constant 0 : index
    %c0_34 = arith.constant 0 : index
    %77 = vector.load %arg5[%c2, %c0_33, %c0_34] : memref<3x64x128xbf16, #tpu.memory_space<vmem>>, vector<1x64x128xbf16>
    %78 = vector.shape_cast %77 : vector<1x64x128xbf16> to vector<64x128xbf16>
    %cst_35 = arith.constant dense<0.000000e+00> : vector<32x128xf32>
    %79 = tpu.matmul %69, %78, %cst_35 {dimension_numbers = #tpu.dot_dimension_numbers<[1], [0], [0], [1], [0, 0, 1, 1], [], []>} : vector<32x64xbf16>, vector<64x128xbf16>, vector<32x128xf32> -> vector<32x128xf32>
    %80 = arith.addf %76, %79 : vector<32x128xf32>
    %c0_36 = arith.constant 0 : index
    %c0_37 = arith.constant 0 : index
    %81 = vector.load %arg6[%c0_36, %c0_37] : memref<1x128xf32, #tpu.memory_space<vmem>>, vector<1x128xf32>
    %82 = vector.broadcast %81 : vector<1x128xf32> to vector<32x128xf32>
    %83 = arith.addf %80, %82 : vector<32x128xf32>
    %c0_38 = arith.constant 0 : index
    %c0_39 = arith.constant 0 : index
    %84 = vector.load %arg9[%c0_38, %c0_39] : memref<128x128xf32, #tpu.memory_space<vmem>>, vector<128x128xf32>
    %cst_40 = arith.constant dense<0.000000e+00> : vector<128xf32>
    %85 = vector.multi_reduction <add>, %83, %cst_40 [0] : vector<32x128xf32> to vector<128xf32>
    %86 = vector.shape_cast %85 : vector<128xf32> to vector<1x128xf32>
    %cst_41 = arith.constant dense<0.000000e+00> : vector<1x128xf32>
    %87 = tpu.matmul %86, %84, %cst_41 {dimension_numbers = #tpu.dot_dimension_numbers<[1], [0], [0], [1], [0, 0, 1, 1], [], []>} : vector<1x128xf32>, vector<128x128xf32>, vector<1x128xf32> -> vector<1x128xf32>
    %cst_42 = arith.constant 0.001953125 : f32
    %88 = vector.broadcast %cst_42 : f32 to vector<1x128xf32>
    %89 = arith.mulf %87, %88 : vector<1x128xf32>
    %90 = vector.broadcast %89 : vector<1x128xf32> to vector<32x128xf32>
    %91 = arith.subf %83, %90 : vector<32x128xf32>
    %92 = arith.mulf %91, %91 : vector<32x128xf32>
    %cst_43 = arith.constant dense<0.000000e+00> : vector<128xf32>
    %93 = vector.multi_reduction <add>, %92, %cst_43 [0] : vector<32x128xf32> to vector<128xf32>
    %94 = vector.shape_cast %93 : vector<128xf32> to vector<1x128xf32>
    %cst_44 = arith.constant dense<0.000000e+00> : vector<1x128xf32>
    %95 = tpu.matmul %94, %84, %cst_44 {dimension_numbers = #tpu.dot_dimension_numbers<[1], [0], [0], [1], [0, 0, 1, 1], [], []>} : vector<1x128xf32>, vector<128x128xf32>, vector<1x128xf32> -> vector<1x128xf32>
    %cst_45 = arith.constant 0.001953125 : f32
    %96 = vector.broadcast %cst_45 : f32 to vector<1x128xf32>
    %97 = arith.mulf %95, %96 : vector<1x128xf32>
    %c0_46 = arith.constant 0 : index
    %c0_47 = arith.constant 0 : index
    %98 = vector.load %arg7[%c0_46, %c0_47] : memref<1x128xf32, #tpu.memory_space<vmem>>, vector<1x128xf32>
    %cst_48 = arith.constant 9.99999974E-6 : f32
    %99 = vector.broadcast %cst_48 : f32 to vector<1x128xf32>
    %100 = arith.addf %97, %99 : vector<1x128xf32>
    %101 = math.rsqrt %100 : vector<1x128xf32>
    %102 = arith.mulf %98, %101 : vector<1x128xf32>
    %103 = vector.broadcast %102 : vector<1x128xf32> to vector<32x128xf32>
    %104 = arith.mulf %91, %103 : vector<32x128xf32>
    %c0_49 = arith.constant 0 : index
    %c0_50 = arith.constant 0 : index
    %105 = vector.load %arg8[%c0_49, %c0_50] : memref<1x128xf32, #tpu.memory_space<vmem>>, vector<1x128xf32>
    %106 = vector.broadcast %105 : vector<1x128xf32> to vector<32x128xf32>
    %107 = arith.addf %104, %106 : vector<32x128xf32>
    %cst_51 = arith.constant 0.000000e+00 : f32
    %108 = vector.broadcast %cst_51 : f32 to vector<32x128xf32>
    %109 = arith.maximumf %107, %108 : vector<32x128xf32>
    %110 = arith.truncf %109 : vector<32x128xf32> to vector<32x128xbf16>
    %cst_52 = arith.constant dense<0.000000e+00> : vector<32x128xf32>
    %111 = tpu.matmul %28, %110, %cst_52 {dimension_numbers = #tpu.dot_dimension_numbers<[1], [0], [0], [1], [0, 0, 1, 1], [], []>} : vector<32x32xbf16>, vector<32x128xbf16>, vector<32x128xf32> -> vector<32x128xf32>
    %112 = arith.truncf %111 : vector<32x128xf32> to vector<32x128xbf16>
    %cst_53 = arith.constant dense<0.000000e+00> : vector<32x128xf32>
    %113 = tpu.matmul %38, %110, %cst_53 {dimension_numbers = #tpu.dot_dimension_numbers<[1], [0], [0], [1], [0, 0, 1, 1], [], []>} : vector<32x32xbf16>, vector<32x128xbf16>, vector<32x128xf32> -> vector<32x128xf32>
    %114 = arith.truncf %113 : vector<32x128xf32> to vector<32x128xbf16>
    %c0_54 = arith.constant 0 : index
    %c0_55 = arith.constant 0 : index
    %c0_56 = arith.constant 0 : index
    %115 = vector.load %arg10[%c0_54, %c0_55, %c0_56] : memref<3x128x128xbf16, #tpu.memory_space<vmem>>, vector<1x128x128xbf16>
    %116 = vector.shape_cast %115 : vector<1x128x128xbf16> to vector<128x128xbf16>
    %cst_57 = arith.constant dense<0.000000e+00> : vector<32x128xf32>
    %117 = tpu.matmul %112, %116, %cst_57 {dimension_numbers = #tpu.dot_dimension_numbers<[1], [0], [0], [1], [0, 0, 1, 1], [], []>} : vector<32x128xbf16>, vector<128x128xbf16>, vector<32x128xf32> -> vector<32x128xf32>
    %c1_58 = arith.constant 1 : index
    %c0_59 = arith.constant 0 : index
    %c0_60 = arith.constant 0 : index
    %118 = vector.load %arg10[%c1_58, %c0_59, %c0_60] : memref<3x128x128xbf16, #tpu.memory_space<vmem>>, vector<1x128x128xbf16>
    %119 = vector.shape_cast %118 : vector<1x128x128xbf16> to vector<128x128xbf16>
    %cst_61 = arith.constant dense<0.000000e+00> : vector<32x128xf32>
    %120 = tpu.matmul %110, %119, %cst_61 {dimension_numbers = #tpu.dot_dimension_numbers<[1], [0], [0], [1], [0, 0, 1, 1], [], []>} : vector<32x128xbf16>, vector<128x128xbf16>, vector<32x128xf32> -> vector<32x128xf32>
    %121 = arith.addf %117, %120 : vector<32x128xf32>
    %c2_62 = arith.constant 2 : index
    %c0_63 = arith.constant 0 : index
    %c0_64 = arith.constant 0 : index
    %122 = vector.load %arg10[%c2_62, %c0_63, %c0_64] : memref<3x128x128xbf16, #tpu.memory_space<vmem>>, vector<1x128x128xbf16>
    %123 = vector.shape_cast %122 : vector<1x128x128xbf16> to vector<128x128xbf16>
    %cst_65 = arith.constant dense<0.000000e+00> : vector<32x128xf32>
    %124 = tpu.matmul %114, %123, %cst_65 {dimension_numbers = #tpu.dot_dimension_numbers<[1], [0], [0], [1], [0, 0, 1, 1], [], []>} : vector<32x128xbf16>, vector<128x128xbf16>, vector<32x128xf32> -> vector<32x128xf32>
    %125 = arith.addf %121, %124 : vector<32x128xf32>
    %c0_66 = arith.constant 0 : index
    %c0_67 = arith.constant 0 : index
    %126 = vector.load %arg11[%c0_66, %c0_67] : memref<1x128xf32, #tpu.memory_space<vmem>>, vector<1x128xf32>
    %127 = vector.broadcast %126 : vector<1x128xf32> to vector<32x128xf32>
    %128 = arith.addf %125, %127 : vector<32x128xf32>
    %129 = arith.truncf %0 : vector<32x64xf32> to vector<32x64xbf16>
    %c0_68 = arith.constant 0 : index
    %c0_69 = arith.constant 0 : index
    %130 = vector.load %arg12[%c0_68, %c0_69] : memref<64x128xbf16, #tpu.memory_space<vmem>>, vector<64x128xbf16>
    %cst_70 = arith.constant dense<0.000000e+00> : vector<32x128xf32>
    %131 = tpu.matmul %129, %130, %cst_70 {dimension_numbers = #tpu.dot_dimension_numbers<[1], [0], [0], [1], [0, 0, 1, 1], [], []>} : vector<32x64xbf16>, vector<64x128xbf16>, vector<32x128xf32> -> vector<32x128xf32>
    %c0_71 = arith.constant 0 : index
    %c0_72 = arith.constant 0 : index
    %132 = vector.load %arg13[%c0_71, %c0_72] : memref<1x128xf32, #tpu.memory_space<vmem>>, vector<1x128xf32>
    %133 = vector.broadcast %132 : vector<1x128xf32> to vector<32x128xf32>
    %134 = arith.addf %131, %133 : vector<32x128xf32>
    %135 = arith.addf %128, %134 : vector<32x128xf32>
    %c0_73 = arith.constant 0 : index
    %c0_74 = arith.constant 0 : index
    %136 = vector.load %arg14[%c0_73, %c0_74] : memref<32x128xf32, #tpu.memory_space<vmem>>, vector<32x128xf32>
    tpu.vector_store %arg14[%c0_73, %c0_74], %135 {strides = array<i32>} : memref<32x128xf32, #tpu.memory_space<vmem>>, vector<32x128xf32>,
    return
  }
  func.func @transform_0(%arg0: i32) -> (i32, i32) {
    %c0_i32 = arith.constant 0 : i32
    %c0_i32_0 = arith.constant 0 : i32
    %c0_i32_1 = arith.constant 0 : i32
    return %c0_i32, %c0_i32_0 : i32, i32
  }
  func.func @transform_1(%arg0: i32) -> (i32, i32) {
    %c0_i32 = arith.constant 0 : i32
    %c0_i32_0 = arith.constant 0 : i32
    %c0_i32_1 = arith.constant 0 : i32
    return %c0_i32, %c0_i32_0 : i32, i32
  }
  func.func @transform_2(%arg0: i32) -> (i32, i32) {
    %c0_i32 = arith.constant 0 : i32
    %c0_i32_0 = arith.constant 0 : i32
    %c0_i32_1 = arith.constant 0 : i32
    return %c0_i32, %c0_i32_0 : i32, i32
  }
  func.func @transform_3(%arg0: i32) -> (i32, i32) {
    %c0_i32 = arith.constant 0 : i32
    %c0_i32_0 = arith.constant 0 : i32
    %c0_i32_1 = arith.constant 0 : i32
    return %c0_i32, %c0_i32_0 : i32, i32
  }
  func.func @transform_4(%arg0: i32) -> (i32, i32, i32) {
    %c0_i32 = arith.constant 0 : i32
    %c0_i32_0 = arith.constant 0 : i32
    %c0_i32_1 = arith.constant 0 : i32
    %c0_i32_2 = arith.constant 0 : i32
    return %c0_i32, %c0_i32_0, %c0_i32_1 : i32, i32, i32
  }
  func.func @transform_5(%arg0: i32) -> (i32, i32) {
    %c0_i32 = arith.constant 0 : i32
    %c0_i32_0 = arith.constant 0 : i32
    %c0_i32_1 = arith.constant 0 : i32
    return %c0_i32, %c0_i32_0 : i32, i32
  }
  func.func @transform_6(%arg0: i32) -> (i32, i32) {
    %c0_i32 = arith.constant 0 : i32
    %c0_i32_0 = arith.constant 0 : i32
    %c0_i32_1 = arith.constant 0 : i32
    return %c0_i32, %c0_i32_0 : i32, i32
  }
  func.func @transform_7(%arg0: i32) -> (i32, i32) {
    %c0_i32 = arith.constant 0 : i32
    %c0_i32_0 = arith.constant 0 : i32
    %c0_i32_1 = arith.constant 0 : i32
    return %c0_i32, %c0_i32_0 : i32, i32
  }
  func.func @transform_8(%arg0: i32) -> (i32, i32) {
    %c0_i32 = arith.constant 0 : i32
    %c0_i32_0 = arith.constant 0 : i32
    %c0_i32_1 = arith.constant 0 : i32
    return %c0_i32, %c0_i32_0 : i32, i32
  }
  func.func @transform_9(%arg0: i32) -> (i32, i32, i32) {
    %c0_i32 = arith.constant 0 : i32
    %c0_i32_0 = arith.constant 0 : i32
    %c0_i32_1 = arith.constant 0 : i32
    %c0_i32_2 = arith.constant 0 : i32
    return %c0_i32, %c0_i32_0, %c0_i32_1 : i32, i32, i32
  }
  func.func @transform_10(%arg0: i32) -> (i32, i32) {
    %c0_i32 = arith.constant 0 : i32
    %c0_i32_0 = arith.constant 0 : i32
    %c0_i32_1 = arith.constant 0 : i32
    return %c0_i32, %c0_i32_0 : i32, i32
  }
  func.func @transform_11(%arg0: i32) -> (i32, i32) {
    %c0_i32 = arith.constant 0 : i32
    %c0_i32_0 = arith.constant 0 : i32
    %c0_i32_1 = arith.constant 0 : i32
    return %c0_i32, %c0_i32_0 : i32, i32
  }
  func.func @transform_12(%arg0: i32) -> (i32, i32) {
    %c0_i32 = arith.constant 0 : i32
    %c0_i32_0 = arith.constant 0 : i32
    %c0_i32_1 = arith.constant 0 : i32
    return %c0_i32, %c0_i32_0 : i32, i32
  }
  func.func @transform_13(%arg0: i32) -> (i32, i32) {
    %c0_i32 = arith.constant 0 : i32
    %c0_i32_0 = arith.constant 0 : i32
    %c0_i32_1 = arith.constant 0 : i32
    return %c0_i32, %c0_i32_0 : i32, i32
  }
}

</mosaic_0001>

<llo_original>
// kernel: tpu_custom_call.1
$region0: #{tpu_custom_call.1}
  #allocation0 [shape = 'u32[]', space=smem, size = 0x4, offset = 0x4, fixed_abs, tag = 'smem constant byte address 0x4 - core index']
  #allocation1 [shape = 'u32[144,128]{1,0:T(1,128)}', space=vmem, size = 0x12000, scoped, tag = 'internal scratch']
  %s0 = inlined_call_operand.hbm [shape: f32[32,64], index: 0, kind: input, shape index: {}]
  %s1 = inlined_call_operand.vmem [shape: f32[1,64], index: 1, kind: input, shape index: {}]
  %s2 = inlined_call_operand.vmem [shape: f32[1,64], index: 2, kind: input, shape index: {}]
  %s3 = inlined_call_operand.hbm [shape: f32[64,64], index: 3, kind: input, shape index: {}]
  %s4 = inlined_call_operand.hbm [shape: bf16[3,64,128], index: 4, kind: input, shape index: {}]
  %s5 = inlined_call_operand.vmem [shape: f32[1,128], index: 5, kind: input, shape index: {}]
  %s6 = inlined_call_operand.vmem [shape: f32[1,128], index: 6, kind: input, shape index: {}]
  %s7 = inlined_call_operand.vmem [shape: f32[1,128], index: 7, kind: input, shape index: {}]
  %s8 = inlined_call_operand.hbm [shape: f32[128,128], index: 8, kind: input, shape index: {}]
  %s9 = inlined_call_operand.hbm [shape: bf16[3,128,128], index: 9, kind: input, shape index: {}]
  %s10 = inlined_call_operand.vmem [shape: f32[1,128], index: 10, kind: input, shape index: {}]
  %s11 = inlined_call_operand.vmem [shape: bf16[64,128], index: 11, kind: input, shape index: {}]
  %s12 = inlined_call_operand.vmem [shape: f32[1,128], index: 12, kind: input, shape index: {}]
  %s13 = inlined_call_operand.hbm [shape: f32[32,128], index: 13, kind: output, shape index: {}]
  %s14 = sld [smem:[#allocation0]]
  $region82: #{tpu_custom_call.1} parent=0
    _
  %s16 = ssub.s32 1, %s14
  %s17 = scalar_select 0, %s16, %s14
  $region1: #{tpu_custom_call.1} parent=0
    #allocation2 [shape = 'u8[16384]{0}', space=vmem, size = 0x4000, scoped, tag = 'input window, operand 0, single buffered']
    #allocation3 [shape = 's32[1]{0}', space=sflag, size = 0x4, scoped, tag = 'scoped memory for tpu_custom_call.1']
    #allocation4 [shape = 's32[1]{0}', space=sflag, size = 0x4, scoped, tag = 'scoped memory for tpu_custom_call.1']
    #allocation5 [shape = 'u8[32768]{0}', space=vmem, size = 0x8000, scoped, tag = 'input window, operand 3, single buffered']
    #allocation6 [shape = 's32[1]{0}', space=sflag, size = 0x4, scoped, tag = 'scoped memory for tpu_custom_call.1']
    #allocation7 [shape = 'u8[49152]{0}', space=vmem, size = 0xc000, scoped, tag = 'input window, operand 4, single buffered']
    #allocation8 [shape = 'u8[65536]{0}', space=vmem, size = 0x10000, scoped, tag = 'input window, operand 8, single buffered']
    #allocation9 [shape = 's32[1]{0}', space=sflag, size = 0x4, scoped, tag = 'scoped memory for tpu_custom_call.1']
    #allocation10 [shape = 'u8[98304]{0}', space=vmem, size = 0x18000, scoped, tag = 'input window, operand 9, single buffered']
    #allocation11 [shape = 'u8[16384]{0}', space=vmem, size = 0x4000, scoped, tag = 'output window, operand 0, single buffered']
    %18 = vsyncpa [#allocation3], 0
    %19 = vsyncpa [#allocation6], 0
    %20 = vsyncpa [#allocation9], 0
    %21 = vsyncpa [#allocation4], 0
    // Predicated region
    $region2: #{tpu_custom_call.1} parent=1 // pred_check
      _
    $region3: #{tpu_custom_call.1} parent=1 // pred_check_branch
      %23 = sbr.rel (0) target = $region5
    $region4: #{tpu_custom_call.1} parent=1 // pred_region
      %s25 = ssub.s32 512, 512
      %26 = vsyncadd [#allocation3], %s25
      %s27 = sshll.u32 [#allocation2], 4
      %s28 = int_to_ptr.vmem [resolvable:$true] %s27
      %33 = dma.hbm_to_vmem [thread:$0]  %s0, 512, %s28, [#allocation3], 128, 128, 8
    $region5: #{tpu_custom_call.1} parent=1 // pred_fallthru
      _
    // Predicated region
    $region6: #{tpu_custom_call.1} parent=1 // pred_check
      _
    $region7: #{tpu_custom_call.1} parent=1 // pred_check_branch
      %35 = sbr.rel (0) target = $region9
    $region8: #{tpu_custom_call.1} parent=1 // pred_region
      _
    $region9: #{tpu_custom_call.1} parent=1 // pred_fallthru
      _
    // Predicated region
    $region10: #{tpu_custom_call.1} parent=1 // pred_check
      _
    $region11: #{tpu_custom_call.1} parent=1 // pred_check_branch
      %37 = sbr.rel (0) target = $region13
    $region12: #{tpu_custom_call.1} parent=1 // pred_region
      _
    $region13: #{tpu_custom_call.1} parent=1 // pred_fallthru
      _
    // Predicated region
    $region14: #{tpu_custom_call.1} parent=1 // pred_check
      _
    $region15: #{tpu_custom_call.1} parent=1 // pred_check_branch
      %39 = sbr.rel (0) target = $region17
    $region16: #{tpu_custom_call.1} parent=1 // pred_region
      %s41 = ssub.s32 1024, 1024
      %42 = vsyncadd [#allocation6], %s41
      %s43 = sshll.u32 [#allocation5], 4
      %s44 = int_to_ptr.vmem [resolvable:$true] %s43
      %49 = dma.hbm_to_vmem [thread:$0]  %s3, 1024, %s44, [#allocation6], 128, 128, 8
    $region17: #{tpu_custom_call.1} parent=1 // pred_fallthru
      _
    // Predicated region
    $region18: #{tpu_custom_call.1} parent=1 // pred_check
      _
    $region19: #{tpu_custom_call.1} parent=1 // pred_check_branch
      %51 = sbr.rel (0) target = $region21
    $region20: #{tpu_custom_call.1} parent=1 // pred_region
      %s53 = ssub.s32 1536, 1536
      %54 = vsyncadd [#allocation6], %s53
      %s55 = sshll.u32 [#allocation7], 4
      %s56 = int_to_ptr.vmem [resolvable:$true] %s55
      %61 = dma.hbm_to_vmem [thread:$0]  %s4, 1536, %s56, [#allocation6], 64, 64, 4
    $region21: #{tpu_custom_call.1} parent=1 // pred_fallthru
      _
    // Predicated region
    $region22: #{tpu_custom_call.1} parent=1 // pred_check
      _
    $region23: #{tpu_custom_call.1} parent=1 // pred_check_branch
      %63 = sbr.rel (0) target = $region25
    $region24: #{tpu_custom_call.1} parent=1 // pred_region
      _
    $region25: #{tpu_custom_call.1} parent=1 // pred_fallthru
      _
    // Predicated region
    $region26: #{tpu_custom_call.1} parent=1 // pred_check
      _
    $region27: #{tpu_custom_call.1} parent=1 // pred_check_branch
      %65 = sbr.rel (0) target = $region29
    $region28: #{tpu_custom_call.1} parent=1 // pred_region
      _
    $region29: #{tpu_custom_call.1} parent=1 // pred_fallthru
      _
    // Predicated region
    $region30: #{tpu_custom_call.1} parent=1 // pred_check
      _
    $region31: #{tpu_custom_call.1} parent=1 // pred_check_branch
      %67 = sbr.rel (0) target = $region33
    $region32: #{tpu_custom_call.1} parent=1 // pred_region
      _
    $region33: #{tpu_custom_call.1} parent=1 // pred_fallthru
      _
    // Predicated region
    $region34: #{tpu_custom_call.1} parent=1 // pred_check
      _
    $region35: #{tpu_custom_call.1} parent=1 // pred_check_branch
      %69 = sbr.rel (0) target = $region37
    $region36: #{tpu_custom_call.1} parent=1 // pred_region
      %s71 = ssub.s32 2048, 2048
      %72 = vsyncadd [#allocation9], %s71
      %s73 = sshll.u32 [#allocation8], 4
      %s74 = int_to_ptr.vmem [resolvable:$true] %s73
      %79 = dma.hbm_to_vmem [thread:$0]  %s8, 2048, %s74, [#allocation9], 128, 128, 8
    $region37: #{tpu_custom_call.1} parent=1 // pred_fallthru
      _
    // Predicated region
    $region38: #{tpu_custom_call.1} parent=1 // pred_check
      _
    $region39: #{tpu_custom_call.1} parent=1 // pred_check_branch
      %81 = sbr.rel (0) target = $region41
    $region40: #{tpu_custom_call.1} parent=1 // pred_region
      %s83 = ssub.s32 3072, 3072
      %84 = vsyncadd [#allocation9], %s83
      %s85 = sshll.u32 [#allocation10], 4
      %s86 = int_to_ptr.vmem [resolvable:$true] %s85
      %91 = dma.hbm_to_vmem [thread:$0]  %s9, 3072, %s86, [#allocation9], 64, 64, 4
    $region41: #{tpu_custom_call.1} parent=1 // pred_fallthru
      _
    // Predicated region
    $region42: #{tpu_custom_call.1} parent=1 // pred_check
      _
    $region43: #{tpu_custom_call.1} parent=1 // pred_check_branch
      %93 = sbr.rel (0) target = $region45
    $region44: #{tpu_custom_call.1} parent=1 // pred_region
      _
    $region45: #{tpu_custom_call.1} parent=1 // pred_fallthru
      _
    // Predicated region
    $region46: #{tpu_custom_call.1} parent=1 // pred_check
      _
    $region47: #{tpu_custom_call.1} parent=1 // pred_check_branch
      %95 = sbr.rel (0) target = $region49
    $region48: #{tpu_custom_call.1} parent=1 // pred_region
      _
    $region49: #{tpu_custom_call.1} parent=1 // pred_fallthru
      _
    // Predicated region
    $region50: #{tpu_custom_call.1} parent=1 // pred_check
      _
    $region51: #{tpu_custom_call.1} parent=1 // pred_check_branch
      %97 = sbr.rel (0) target = $region53
    $region52: #{tpu_custom_call.1} parent=1 // pred_region
      _
    $region53: #{tpu_custom_call.1} parent=1 // pred_fallthru
      _
    // Predicated region
    $region54: #{tpu_custom_call.1} parent=1 // pred_check
      _
    $region55: #{tpu_custom_call.1} parent=1 // pred_check_branch
      %99 = sbr.rel (0) target = $region57
    $region56: #{tpu_custom_call.1} parent=1 // pred_region
      %100 = dma.done [#allocation3], 512
    $region57: #{tpu_custom_call.1} parent=1 // pred_fallthru
      _
    // Predicated region
    $region58: #{tpu_custom_call.1} parent=1 // pred_check
      _
    $region59: #{tpu_custom_call.1} parent=1 // pred_check_branch
      %102 = sbr.rel (0) target = $region61
    $region60: #{tpu_custom_call.1} parent=1 // pred_region
      %103 = dma.done [#allocation6], 1024
    $region61: #{tpu_custom_call.1} parent=1 // pred_fallthru
      _
    // Predicated region
    $region62: #{tpu_custom_call.1} parent=1 // pred_check
      _
    $region63: #{tpu_custom_call.1} parent=1 // pred_check_branch
      %105 = sbr.rel (0) target = $region65
    $region64: #{tpu_custom_call.1} parent=1 // pred_region
      %106 = dma.done [#allocation6], 1536
    $region65: #{tpu_custom_call.1} parent=1 // pred_fallthru
      _
    // Predicated region
    $region66: #{tpu_custom_call.1} parent=1 // pred_check
      _
    $region67: #{tpu_custom_call.1} parent=1 // pred_check_branch
      %108 = sbr.rel (0) target = $region69
    $region68: #{tpu_custom_call.1} parent=1 // pred_region
      %109 = dma.done [#allocation9], 2048
    $region69: #{tpu_custom_call.1} parent=1 // pred_fallthru
      _
    // Predicated region
    $region70: #{tpu_custom_call.1} parent=1 // pred_check
      _
    $region71: #{tpu_custom_call.1} parent=1 // pred_check_branch
      %111 = sbr.rel (0) target = $region73
    $region72: #{tpu_custom_call.1} parent=1 // pred_region
      %112 = dma.done [#allocation9], 3072
    $region73: #{tpu_custom_call.1} parent=1 // pred_fallthru
      _
    %v114 = vld [vmem:[#allocation2] sm:$0xff]
    %v115 = vld [vmem:[#allocation2 + $0x8] sm:$0xff]
    %v116 = vld [vmem:[#allocation2 + $0x10] sm:$0xff]
    %v117 = vld [vmem:[#allocation2 + $0x18] sm:$0xff]
    %v118 = vlaneseq
    %v119 = vshrl.u32 %v118, 7
    %v120 = vadd.s32 %v119, 8
    %v121 = vadd.s32 %v119, 16
    %v122 = vadd.s32 %v119, 24
    %v123 = vlaneseq
    %v124 = vand.u32 %v123, 127
    %vm125 = vcmp.lt.s32.totalorder %v119, 0
    %v126 = vsub.s32 0, %v119
    %v127 = vsel %vm125, %v126, %v119
    %v128 = vshrl.u32 %v127, 4
    %v129 = vand.u32 %v127, 15
    %v130 = vsub.s32 0, %v129
    %v131 = vsel %vm125, %v130, %v129
    %vm132 = vcmp.lt.s32.totalorder %v120, 0
    %v133 = vsub.s32 0, %v120
    %v134 = vsel %vm132, %v133, %v120
    %v135 = vshrl.u32 %v134, 4
    %v136 = vand.u32 %v134, 15
    %v137 = vsub.s32 0, %v136
    %v138 = vsel %vm132, %v137, %v136
    %vm139 = vcmp.lt.s32.totalorder %v121, 0
    %v140 = vsub.s32 0, %v121
    %v141 = vsel %vm139, %v140, %v121
    %v142 = vshrl.u32 %v141, 4
    %v143 = vand.u32 %v141, 15
    %v144 = vsub.s32 0, %v143
    %v145 = vsel %vm139, %v144, %v143
    %vm146 = vcmp.lt.s32.totalorder %v122, 0
    %v147 = vsub.s32 0, %v122
    %v148 = vsel %vm146, %v147, %v122
    %v149 = vshrl.u32 %v148, 4
    %v150 = vand.u32 %v148, 15
    %v151 = vsub.s32 0, %v150
    %v152 = vsel %vm146, %v151, %v150
    %vm153 = vcmp.ne.s32.totalorder %v131, 0
    %vm154 = vcmp.ne.s32.totalorder %v138, 0
    %vm155 = vcmp.ne.s32.totalorder %v145, 0
    %vm156 = vcmp.ne.s32.totalorder %v152, 0
    %vm157 = vcmp.lt.s32.totalorder %v131, 0
    %vm158 = vcmp.lt.s32.totalorder %v138, 0
    %vm159 = vcmp.lt.s32.totalorder %v145, 0
    %vm160 = vcmp.lt.s32.totalorder %v152, 0
    %vm161 = vmand %vm157, %vm153
    %vm162 = vmand %vm158, %vm154
    %vm163 = vmand %vm159, %vm155
    %vm164 = vmand %vm160, %vm156
    %v165 = vadd.s32 %v131, 16
    %v166 = vadd.s32 %v138, 16
    %v167 = vadd.s32 %v145, 16
    %v168 = vadd.s32 %v152, 16
    %v169 = vsel %vm161, %v165, %v131
    %v170 = vsel %vm162, %v166, %v138
    %v171 = vsel %vm163, %v167, %v145
    %v172 = vsel %vm164, %v168, %v152
    %v173 = vsub.s32 %v119, 1
    %v174 = vsub.s32 %v120, 1
    %v175 = vsub.s32 %v121, 1
    %v176 = vsub.s32 %v122, 1
    %vm177 = vcmp.eq.s32.totalorder %v124, %v173
    %vm178 = vcmp.eq.s32.totalorder %v124, %v174
    %vm179 = vcmp.eq.s32.totalorder %v124, %v175
    %vm180 = vcmp.eq.s32.totalorder %v124, %v176
    %vm181 = vcmp.ne.s32.totalorder %v169, 0
    %vm182 = vcmp.ne.s32.totalorder %v170, 0
    %vm183 = vcmp.ne.s32.totalorder %v171, 0
    %vm184 = vcmp.ne.s32.totalorder %v172, 0
    %vm185 = vmand %vm177, %vm181
    %vm186 = vmand %vm178, %vm182
    %vm187 = vmand %vm179, %vm183
    %vm188 = vmand %vm180, %vm184
    %v189 = vsel %vm185, 1.0, 0.0
    %v190 = vsel %vm186, 1.0, 0.0
    %v191 = vsel %vm187, 1.0, 0.0
    %v192 = vsel %vm188, 1.0, 0.0
    %v193 = vpack.c.bf16 %v190, %v189
    %v194 = vpack.c.bf16 %v192, %v191
    %v195 = vadd.s32 %v119, 1
    %v196 = vadd.s32 %v120, 1
    %v197 = vadd.s32 %v121, 1
    %v198 = vadd.s32 %v122, 1
    %vm199 = vcmp.eq.s32.totalorder %v124, %v195
    %vm200 = vcmp.eq.s32.totalorder %v124, %v196
    %vm201 = vcmp.eq.s32.totalorder %v124, %v197
    %vm202 = vcmp.eq.s32.totalorder %v124, %v198
    %vm203 = vcmp.ne.s32.totalorder %v169, 15
    %vm204 = vcmp.ne.s32.totalorder %v170, 15
    %vm205 = vcmp.ne.s32.totalorder %v171, 15
    %vm206 = vcmp.ne.s32.totalorder %v172, 15
    %vm207 = vmand %vm199, %vm203
    %vm208 = vmand %vm200, %vm204
    %vm209 = vmand %vm201, %vm205
    %vm210 = vmand %vm202, %vm206
    %v211 = vsel %vm207, 1.0, 0.0
    %v212 = vsel %vm208, 1.0, 0.0
    %v213 = vsel %vm209, 1.0, 0.0
    %v214 = vsel %vm210, 1.0, 0.0
    %v215 = vpack.c.bf16 %v212, %v211
    %v216 = vpack.c.bf16 %v214, %v213
    %v217 = vld [vmem:[#allocation5] sm:$0xff]
    %v218 = vld [vmem:[#allocation5 + $0x8] sm:$0xff]
    %v219 = vld [vmem:[#allocation5 + $0x10] sm:$0xff]
    %v220 = vld [vmem:[#allocation5 + $0x18] sm:$0xff]
    %v221 = vld [vmem:[#allocation5 + $0x20] sm:$0xff]
    %v222 = vld [vmem:[#allocation5 + $0x28] sm:$0xff]
    %v223 = vld [vmem:[#allocation5 + $0x30] sm:$0xff]
    %v224 = vld [vmem:[#allocation5 + $0x38] sm:$0xff]
    %vm225 = vcmask 523264
    %v226 = vsel %vm225, %v114, 0.0
    %v227 = vsel %vm225, %v115, 0.0
    %v228 = vadd.f32 %v226, %v227
    %v229 = vsel %vm225, %v116, 0.0
    %v230 = vadd.f32 %v228, %v229
    %v231 = vsel %vm225, %v117, 0.0
    %v232 = vadd.f32 %v230, %v231
    %v233 = vrot.slane %v232, 4
    %v234 = vadd.f32 %v232, %v233
    %v235 = vrot.slane %v234, 2
    %v236 = vadd.f32 %v234, %v235
    %v237 = vrot.slane %v236, 1
    %v238 = vadd.f32 %v236, %v237
    %v240 = vsel %vm225, %v238, 0
    %242 = vmatprep.subr.mxu0 0.0
    %243 = vmatpush1.msra.mxu0 %v217
    %244 = vmatprep.subr.mxu0 0.0
    %245 = vmatpush1.msra.mxu0 %v218
    %246 = vmatprep.subr.mxu0 0.0
    %247 = vmatpush1.msra.mxu0 %v219
    %248 = vmatprep.subr.mxu0 0.0
    %249 = vmatpush1.msra.mxu0 %v220
    %250 = vmatprep.subr.mxu0 0.0
    %251 = vmatpush1.msra.mxu0 %v221
    %252 = vmatprep.subr.mxu0 0.0
    %253 = vmatpush1.msra.mxu0 %v222
    %254 = vmatprep.subr.mxu0 0.0
    %255 = vmatpush1.msra.mxu0 %v223
    %256 = vmatprep.subr.mxu0 0.0
    %257 = vmatpush1.msra.mxu0 %v224
    %258 = vmatprep.subr.mxu0 0.0
    %259 = vmatpush1.msra.mxu0 0.0
    %260 = vmatprep.subr.mxu0 0.0
    %261 = vmatpush1.msra.mxu0 0.0
    %262 = vmatprep.subr.mxu0 0.0
    %263 = vmatpush1.msra.mxu0 0.0
    %264 = vmatprep.subr.mxu0 0.0
    %265 = vmatpush1.msra.mxu0 0.0
    %266 = vmatprep.subr.mxu0 0.0
    %267 = vmatpush1.msra.mxu0 0.0
    %268 = vmatprep.subr.mxu0 0.0
    %269 = vmatpush1.msra.mxu0 0.0
    %270 = vmatprep.subr.mxu0 0.0
    %271 = vmatpush1.msra.mxu0 0.0
    %272 = vmatprep.subr.mxu0 0.0
    %273 = vmatpush1.msra.mxu0 0.0
    %274 = vmatprep.subr.mxu0 0.0
    %275 = vmatpush1.msra.mxu0 0.0
    %276 = vmatprep.subr.mxu0 0.0
    %277 = vmatpush1.msra.mxu0 0.0
    %278 = vmatprep.subr.mxu0 0.0
    %279 = vmatpush1.msra.mxu0 0.0
    %280 = vmatprep.subr.mxu0 0.0
    %281 = vmatpush1.msra.mxu0 0.0
    %282 = vmatprep.subr.mxu0 0.0
    %283 = vmatpush1.msra.mxu0 0.0
    %284 = vmatprep.subr.mxu0 0.0
    %285 = vmatpush1.msra.mxu0 0.0
    %286 = vmatprep.subr.mxu0 0.0
    %287 = vmatpush1.msra.mxu0 0.0
    %288 = vmatprep.subr.mxu0 0.0
    %289 = vmatpush1.msra.mxu0 0.0
    %290 = vmatprep.subr.mxu0 0.0
    %291 = vmatpush1.msra.mxu0 0.0
    %292 = vmatprep.subr.mxu0 0.0
    %293 = vmatpush1.msra.mxu0 0.0
    %294 = vmatprep.subr.mxu0 0.0
    %295 = vmatpush1.msra.mxu0 0.0
    %296 = vmatprep.subr.mxu0 0.0
    %297 = vmatpush1.msra.mxu0 0.0
    %298 = vmatprep.subr.mxu0 0.0
    %299 = vmatpush1.msra.mxu0 0.0
    %300 = vmatprep.subr.mxu0 0.0
    %301 = vmatpush1.msra.mxu0 0.0
    %302 = vmatprep.subr.mxu0 0.0
    %303 = vmatpush1.msra.mxu0 0.0
    %304 = vmatprep.subr.mxu0 0.0
    %305 = vmatpush1.msra.mxu0 0.0
    %306 = vmatprep.mubr.f32.mxu0 0.0
    %307 = vmatmul.mubr.f32.gmra.mrb[0].mxu0 %v240
    %v308 = vpop.f32.mrb[0].mxu0
    %v309 = vadd.f32 0.0, %v308
    %v310 = vpop.f32.mrb[0].mxu0
    %311 = vdwg.mxu0
    %v312 = vmul.f32 %v309, 0.001953125
    %v313 = vlaneseq
    %v314 = vshrl.u32 %v313, 7
    %v315 = vsub.s32 0, %v314
    %v316 = vrot.slane %v312, %v315
    %v317 = vsub.f32 %v114, %v316
    %v318 = vsub.f32 %v115, %v316
    %v319 = vsub.f32 %v116, %v316
    %v320 = vsub.f32 %v117, %v316
    %v321 = vmul.f32 %v317, %v317
    %v322 = vmul.f32 %v318, %v318
    %v323 = vmul.f32 %v319, %v319
    %v324 = vmul.f32 %v320, %v320
    %v325 = vsel %vm225, %v321, 0.0
    %v326 = vsel %vm225, %v322, 0.0
    %v327 = vadd.f32 %v325, %v326
    %v328 = vsel %vm225, %v323, 0.0
    %v329 = vadd.f32 %v327, %v328
    %v330 = vsel %vm225, %v324, 0.0
    %v331 = vadd.f32 %v329, %v330
    %v332 = vrot.slane %v331, 4
    %v333 = vadd.f32 %v331, %v332
    %v334 = vrot.slane %v333, 2
    %v335 = vadd.f32 %v333, %v334
    %v336 = vrot.slane %v335, 1
    %v337 = vadd.f32 %v335, %v336
    %v339 = vsel %vm225, %v337, 0
    %341 = vmatprep.subr.mxu0 0.0
    %342 = vmatpush1.msra.mxu0 %v217
    %343 = vmatprep.subr.mxu0 0.0
    %344 = vmatpush1.msra.mxu0 %v218
    %345 = vmatprep.subr.mxu0 0.0
    %346 = vmatpush1.msra.mxu0 %v219
    %347 = vmatprep.subr.mxu0 0.0
    %348 = vmatpush1.msra.mxu0 %v220
    %349 = vmatprep.subr.mxu0 0.0
    %350 = vmatpush1.msra.mxu0 %v221
    %351 = vmatprep.subr.mxu0 0.0
    %352 = vmatpush1.msra.mxu0 %v222
    %353 = vmatprep.subr.mxu0 0.0
    %354 = vmatpush1.msra.mxu0 %v223
    %355 = vmatprep.subr.mxu0 0.0
    %356 = vmatpush1.msra.mxu0 %v224
    %357 = vmatprep.subr.mxu0 0.0
    %358 = vmatpush1.msra.mxu0 0.0
    %359 = vmatprep.subr.mxu0 0.0
    %360 = vmatpush1.msra.mxu0 0.0
    %361 = vmatprep.subr.mxu0 0.0
    %362 = vmatpush1.msra.mxu0 0.0
    %363 = vmatprep.subr.mxu0 0.0
    %364 = vmatpush1.msra.mxu0 0.0
    %365 = vmatprep.subr.mxu0 0.0
    %366 = vmatpush1.msra.mxu0 0.0
    %367 = vmatprep.subr.mxu0 0.0
    %368 = vmatpush1.msra.mxu0 0.0
    %369 = vmatprep.subr.mxu0 0.0
    %370 = vmatpush1.msra.mxu0 0.0
    %371 = vmatprep.subr.mxu0 0.0
    %372 = vmatpush1.msra.mxu0 0.0
    %373 = vmatprep.subr.mxu0 0.0
    %374 = vmatpush1.msra.mxu0 0.0
    %375 = vmatprep.subr.mxu0 0.0
    %376 = vmatpush1.msra.mxu0 0.0
    %377 = vmatprep.subr.mxu0 0.0
    %378 = vmatpush1.msra.mxu0 0.0
    %379 = vmatprep.subr.mxu0 0.0
    %380 = vmatpush1.msra.mxu0 0.0
    %381 = vmatprep.subr.mxu0 0.0
    %382 = vmatpush1.msra.mxu0 0.0
    %383 = vmatprep.subr.mxu0 0.0
    %384 = vmatpush1.msra.mxu0 0.0
    %385 = vmatprep.subr.mxu0 0.0
    %386 = vmatpush1.msra.mxu0 0.0
    %387 = vmatprep.subr.mxu0 0.0
    %388 = vmatpush1.msra.mxu0 0.0
    %389 = vmatprep.subr.mxu0 0.0
    %390 = vmatpush1.msra.mxu0 0.0
    %391 = vmatprep.subr.mxu0 0.0
    %392 = vmatpush1.msra.mxu0 0.0
    %393 = vmatprep.subr.mxu0 0.0
    %394 = vmatpush1.msra.mxu0 0.0
    %395 = vmatprep.subr.mxu0 0.0
    %396 = vmatpush1.msra.mxu0 0.0
    %397 = vmatprep.subr.mxu0 0.0
    %398 = vmatpush1.msra.mxu0 0.0
    %399 = vmatprep.subr.mxu0 0.0
    %400 = vmatpush1.msra.mxu0 0.0
    %401 = vmatprep.subr.mxu0 0.0
    %402 = vmatpush1.msra.mxu0 0.0
    %403 = vmatprep.subr.mxu0 0.0
    %404 = vmatpush1.msra.mxu0 0.0
    %405 = vmatprep.mubr.f32.mxu0 0.0
    %406 = vmatmul.mubr.f32.gmra.mrb[0].mxu0 %v339
    %v407 = vpop.f32.mrb[0].mxu0
    %v408 = vadd.f32 0.0, %v407
    %v409 = vpop.f32.mrb[0].mxu0
    %410 = vdwg.mxu0
    %v411 = vmul.f32 %v408, 0.001953125
    %v412 = vld [vmem:[%s1] sm:$0x1]
    %v413 = vadd.f32 %v411, 1e-05
    %v414 = vrsqrt.pop %v413
    %v415 = vmul.f32 %v412, %v414
    %v417 = vlaneseq
    %v418 = vshrl.u32 %v417, 7
    %v419 = vsub.s32 0, %v418
    %v420 = vrot.slane %v415, %v419
    %v422 = vmul.f32 %v317, %v420
    %v423 = vmul.f32 %v318, %v420
    %v424 = vmul.f32 %v319, %v420
    %v425 = vmul.f32 %v320, %v420
    %v426 = vld [vmem:[%s2] sm:$0x1]
    %v428 = vlaneseq
    %v429 = vshrl.u32 %v428, 7
    %v430 = vsub.s32 0, %v429
    %v431 = vrot.slane %v426, %v430
    %v433 = vadd.f32 %v422, %v431
    %v434 = vadd.f32 %v423, %v431
    %v435 = vadd.f32 %v424, %v431
    %v436 = vadd.f32 %v425, %v431
    %v437 = vmax.f32 %v433, 0.0
    %v438 = vmax.f32 %v434, 0.0
    %v439 = vmax.f32 %v435, 0.0
    %v440 = vmax.f32 %v436, 0.0
    %v441 = vpack.c.bf16 %v438, %v437
    %v442 = vpack.c.bf16 %v440, %v439
    %vm443 = vcmask 261120
    %v445 = vsel %vm443, %v193, 0
    %v448 = vsel %vm443, %v194, 0
    %450 = vmatprep.subr.bf16.mxu0 0
    %451 = vmatpush1.bf16.msra.mxu0 %v441
    %452 = vmatprep.subr.bf16.mxu0 0
    %453 = vmatpush1.bf16.msra.mxu0 %v442
    %454 = vmatprep.subr.bf16.mxu0 0
    %455 = vmatpush1.bf16.msra.mxu0 0
    %456 = vmatprep.subr.bf16.mxu0 0
    %457 = vmatpush1.bf16.msra.mxu0 0
    %458 = vmatprep.subr.bf16.mxu0 0
    %459 = vmatpush1.bf16.msra.mxu0 0
    %460 = vmatprep.subr.bf16.mxu0 0
    %461 = vmatpush1.bf16.msra.mxu0 0
    %462 = vmatprep.subr.bf16.mxu0 0
    %463 = vmatpush1.bf16.msra.mxu0 0
    %464 = vmatprep.subr.bf16.mxu0 0
    %465 = vmatpush1.bf16.msra.mxu0 0
    %466 = vmatprep.subr.bf16.mxu0 0
    %467 = vmatpush1.bf16.msra.mxu0 0
    %468 = vmatprep.subr.bf16.mxu0 0
    %469 = vmatpush1.bf16.msra.mxu0 0
    %470 = vmatprep.subr.bf16.mxu0 0
    %471 = vmatpush1.bf16.msra.mxu0 0
    %472 = vmatprep.subr.bf16.mxu0 0
    %473 = vmatpush1.bf16.msra.mxu0 0
    %474 = vmatprep.subr.bf16.mxu0 0
    %475 = vmatpush1.bf16.msra.mxu0 0
    %476 = vmatprep.subr.bf16.mxu0 0
    %477 = vmatpush1.bf16.msra.mxu0 0
    %478 = vmatprep.subr.bf16.mxu0 0
    %479 = vmatpush1.bf16.msra.mxu0 0
    %480 = vmatprep.subr.bf16.mxu0 0
    %481 = vmatpush1.bf16.msra.mxu0 0
    %482 = vmatprep.mubr.bf16.mxu0 0
    %483 = vmatmul.mubr.bf16.gmra.mrb[0].mxu0 %v445
    %v484 = vpop.f32.mrb[0].mxu0
    %v485 = vadd.f32 0.0, %v484
    %v486 = vpop.f32.mrb[0].mxu0
    %v487 = vpop.f32.mrb[0].mxu0
    %v488 = vadd.f32 0.0, %v487
    %v489 = vpop.f32.mrb[0].mxu0
    %490 = vmatprep.mubr.bf16.mxu0 0
    %491 = vmatmul.mubr.bf16.gmra.mrb[0].mxu0 %v448
    %v492 = vpop.f32.mrb[0].mxu0
    %v493 = vadd.f32 0.0, %v492
    %v494 = vpop.f32.mrb[0].mxu0
    %v495 = vpop.f32.mrb[0].mxu0
    %v496 = vadd.f32 0.0, %v495
    %v497 = vpop.f32.mrb[0].mxu0
    %498 = vdwg.mxu0
    %v499 = vpack.c.bf16 %v488, %v485
    %v500 = vpack.c.bf16 %v496, %v493
    %v502 = vsel %vm443, %v215, 0
    %v505 = vsel %vm443, %v216, 0
    %507 = vmatprep.subr.bf16.mxu0 0
    %508 = vmatpush1.bf16.msra.mxu0 %v441
    %509 = vmatprep.subr.bf16.mxu0 0
    %510 = vmatpush1.bf16.msra.mxu0 %v442
    %511 = vmatprep.subr.bf16.mxu0 0
    %512 = vmatpush1.bf16.msra.mxu0 0
    %513 = vmatprep.subr.bf16.mxu0 0
    %514 = vmatpush1.bf16.msra.mxu0 0
    %515 = vmatprep.subr.bf16.mxu0 0
    %516 = vmatpush1.bf16.msra.mxu0 0
    %517 = vmatprep.subr.bf16.mxu0 0
    %518 = vmatpush1.bf16.msra.mxu0 0
    %519 = vmatprep.subr.bf16.mxu0 0
    %520 = vmatpush1.bf16.msra.mxu0 0
    %521 = vmatprep.subr.bf16.mxu0 0
    %522 = vmatpush1.bf16.msra.mxu0 0
    %523 = vmatprep.subr.bf16.mxu0 0
    %524 = vmatpush1.bf16.msra.mxu0 0
    %525 = vmatprep.subr.bf16.mxu0 0
    %526 = vmatpush1.bf16.msra.mxu0 0
    %527 = vmatprep.subr.bf16.mxu0 0
    %528 = vmatpush1.bf16.msra.mxu0 0
    %529 = vmatprep.subr.bf16.mxu0 0
    %530 = vmatpush1.bf16.msra.mxu0 0
    %531 = vmatprep.subr.bf16.mxu0 0
    %532 = vmatpush1.bf16.msra.mxu0 0
    %533 = vmatprep.subr.bf16.mxu0 0
    %534 = vmatpush1.bf16.msra.mxu0 0
    %535 = vmatprep.subr.bf16.mxu0 0
    %536 = vmatpush1.bf16.msra.mxu0 0
    %537 = vmatprep.subr.bf16.mxu0 0
    %538 = vmatpush1.bf16.msra.mxu0 0
    %539 = vmatprep.mubr.bf16.mxu0 0
    %540 = vmatmul.mubr.bf16.gmra.mrb[0].mxu0 %v502
    %v541 = vpop.f32.mrb[0].mxu0
    %v542 = vadd.f32 0.0, %v541
    %v543 = vpop.f32.mrb[0].mxu0
    %v544 = vpop.f32.mrb[0].mxu0
    %v545 = vadd.f32 0.0, %v544
    %v546 = vpop.f32.mrb[0].mxu0
    %547 = vmatprep.mubr.bf16.mxu0 0
    %548 = vmatmul.mubr.bf16.gmra.mrb[0].mxu0 %v505
    %v549 = vpop.f32.mrb[0].mxu0
    %v550 = vadd.f32 0.0, %v549
    %v551 = vpop.f32.mrb[0].mxu0
    %v552 = vpop.f32.mrb[0].mxu0
    %v553 = vadd.f32 0.0, %v552
    %v554 = vpop.f32.mrb[0].mxu0
    %555 = vdwg.mxu0
    %v556 = vpack.c.bf16 %v545, %v542
    %v557 = vpack.c.bf16 %v553, %v550
    %v558 = vld [vmem:[#allocation7] sm:$0xf]
    %v559 = vld [vmem:[#allocation7 + $0x4] sm:$0xf]
    %v560 = vld [vmem:[#allocation7 + $0x8] sm:$0xf]
    %v561 = vld [vmem:[#allocation7 + $0xc] sm:$0xf]
    %v562 = vld [vmem:[#allocation7 + $0x10] sm:$0xf]
    %v563 = vld [vmem:[#allocation7 + $0x14] sm:$0xf]
    %v564 = vld [vmem:[#allocation7 + $0x18] sm:$0xf]
    %v565 = vld [vmem:[#allocation7 + $0x1c] sm:$0xf]
    %s566 = scalar_lea.vmem [#allocation7], 32
    %v567 = vld [vmem:[%s566] sm:$0xf]
    %v568 = vld [vmem:[%s566 + $0x4] sm:$0xf]
    %v569 = vld [vmem:[%s566 + $0x8] sm:$0xf]
    %v570 = vld [vmem:[%s566 + $0xc] sm:$0xf]
    %v571 = vld [vmem:[%s566 + $0x10] sm:$0xf]
    %v572 = vld [vmem:[%s566 + $0x14] sm:$0xf]
    %v573 = vld [vmem:[%s566 + $0x18] sm:$0xf]
    %v574 = vld [vmem:[%s566 + $0x1c] sm:$0xf]
    %v583 = vunpack.c.l.b16 %v567
    %v584 = vunpack.c.l.b16 %v568
    %v585 = vunpack.c.l.b16 %v569
    %v586 = vunpack.c.l.b16 %v570
    %v587 = vunpack.c.l.b16 %v571
    %v588 = vunpack.c.l.b16 %v572
    %v589 = vunpack.c.l.b16 %v573
    %v590 = vunpack.c.l.b16 %v574
    %v591 = vpack.c.b16 %v584, %v583
    %v592 = vpack.c.b16 %v586, %v585
    %v593 = vpack.c.b16 %v588, %v587
    %v594 = vpack.c.b16 %v590, %v589
    %v600 = vsel %vm225, %v441, 0
    %v603 = vsel %vm225, %v442, 0
    %605 = vmatprep.subr.bf16.mxu0 0
    %606 = vmatpush1.bf16.msra.mxu0 %v591
    %607 = vmatprep.subr.bf16.mxu0 0
    %608 = vmatpush1.bf16.msra.mxu0 %v592
    %609 = vmatprep.subr.bf16.mxu0 0
    %610 = vmatpush1.bf16.msra.mxu0 %v593
    %611 = vmatprep.subr.bf16.mxu0 0
    %612 = vmatpush1.bf16.msra.mxu0 %v594
    %613 = vmatprep.subr.bf16.mxu0 0
    %614 = vmatpush1.bf16.msra.mxu0 0
    %615 = vmatprep.subr.bf16.mxu0 0
    %616 = vmatpush1.bf16.msra.mxu0 0
    %617 = vmatprep.subr.bf16.mxu0 0
    %618 = vmatpush1.bf16.msra.mxu0 0
    %619 = vmatprep.subr.bf16.mxu0 0
    %620 = vmatpush1.bf16.msra.mxu0 0
    %621 = vmatprep.subr.bf16.mxu0 0
    %622 = vmatpush1.bf16.msra.mxu0 0
    %623 = vmatprep.subr.bf16.mxu0 0
    %624 = vmatpush1.bf16.msra.mxu0 0
    %625 = vmatprep.subr.bf16.mxu0 0
    %626 = vmatpush1.bf16.msra.mxu0 0
    %627 = vmatprep.subr.bf16.mxu0 0
    %628 = vmatpush1.bf16.msra.mxu0 0
    %629 = vmatprep.subr.bf16.mxu0 0
    %630 = vmatpush1.bf16.msra.mxu0 0
    %631 = vmatprep.subr.bf16.mxu0 0
    %632 = vmatpush1.bf16.msra.mxu0 0
    %633 = vmatprep.subr.bf16.mxu0 0
    %634 = vmatpush1.bf16.msra.mxu0 0
    %635 = vmatprep.subr.bf16.mxu0 0
    %636 = vmatpush1.bf16.msra.mxu0 0
    %637 = vmatprep.mubr.bf16.mxu0 0
    %638 = vmatmul.mubr.bf16.gmra.mrb[0].mxu0 %v600
    %v639 = vpop.f32.mrb[0].mxu0
    %v640 = vadd.f32 0.0, %v639
    %v641 = vpop.f32.mrb[0].mxu0
    %v642 = vpop.f32.mrb[0].mxu0
    %v643 = vadd.f32 0.0, %v642
    %v644 = vpop.f32.mrb[0].mxu0
    %645 = vmatprep.mubr.bf16.mxu0 0
    %646 = vmatmul.mubr.bf16.gmra.mrb[0].mxu0 %v603
    %v647 = vpop.f32.mrb[0].mxu0
    %v648 = vadd.f32 0.0, %v647
    %v649 = vpop.f32.mrb[0].mxu0
    %v650 = vpop.f32.mrb[0].mxu0
    %v651 = vadd.f32 0.0, %v650
    %v652 = vpop.f32.mrb[0].mxu0
    %653 = vdwg.mxu0
    %v662 = vunpack.c.l.b16 %v558
    %v663 = vunpack.c.l.b16 %v559
    %v664 = vunpack.c.l.b16 %v560
    %v665 = vunpack.c.l.b16 %v561
    %v666 = vunpack.c.l.b16 %v562
    %v667 = vunpack.c.l.b16 %v563
    %v668 = vunpack.c.l.b16 %v564
    %v669 = vunpack.c.l.b16 %v565
    %v670 = vpack.c.b16 %v663, %v662
    %v671 = vpack.c.b16 %v665, %v664
    %v672 = vpack.c.b16 %v667, %v666
    %v673 = vpack.c.b16 %v669, %v668
    %v679 = vsel %vm225, %v499, 0
    %v682 = vsel %vm225, %v500, 0
    %684 = vmatprep.subr.bf16.mxu0 0
    %685 = vmatpush1.bf16.msra.mxu0 %v670
    %686 = vmatprep.subr.bf16.mxu0 0
    %687 = vmatpush1.bf16.msra.mxu0 %v671
    %688 = vmatprep.subr.bf16.mxu0 0
    %689 = vmatpush1.bf16.msra.mxu0 %v672
    %690 = vmatprep.subr.bf16.mxu0 0
    %691 = vmatpush1.bf16.msra.mxu0 %v673
    %692 = vmatprep.subr.bf16.mxu0 0
    %693 = vmatpush1.bf16.msra.mxu0 0
    %694 = vmatprep.subr.bf16.mxu0 0
    %695 = vmatpush1.bf16.msra.mxu0 0
    %696 = vmatprep.subr.bf16.mxu0 0
    %697 = vmatpush1.bf16.msra.mxu0 0
    %698 = vmatprep.subr.bf16.mxu0 0
    %699 = vmatpush1.bf16.msra.mxu0 0
    %700 = vmatprep.subr.bf16.mxu0 0
    %701 = vmatpush1.bf16.msra.mxu0 0
    %702 = vmatprep.subr.bf16.mxu0 0
    %703 = vmatpush1.bf16.msra.mxu0 0
    %704 = vmatprep.subr.bf16.mxu0 0
    %705 = vmatpush1.bf16.msra.mxu0 0
    %706 = vmatprep.subr.bf16.mxu0 0
    %707 = vmatpush1.bf16.msra.mxu0 0
    %708 = vmatprep.subr.bf16.mxu0 0
    %709 = vmatpush1.bf16.msra.mxu0 0
    %710 = vmatprep.subr.bf16.mxu0 0
    %711 = vmatpush1.bf16.msra.mxu0 0
    %712 = vmatprep.subr.bf16.mxu0 0
    %713 = vmatpush1.bf16.msra.mxu0 0
    %714 = vmatprep.subr.bf16.mxu0 0
    %715 = vmatpush1.bf16.msra.mxu0 0
    %716 = vmatprep.mubr.bf16.mxu0 0
    %717 = vmatmul.mubr.bf16.gmra.mrb[0].mxu0 %v679
    %v718 = vpop.f32.mrb[0].mxu0
    %v719 = vadd.f32 %v640, %v718
    %v720 = vpop.f32.mrb[0].mxu0
    %v721 = vpop.f32.mrb[0].mxu0
    %v722 = vadd.f32 %v643, %v721
    %v723 = vpop.f32.mrb[0].mxu0
    %724 = vmatprep.mubr.bf16.mxu0 0
    %725 = vmatmul.mubr.bf16.gmra.mrb[0].mxu0 %v682
    %v726 = vpop.f32.mrb[0].mxu0
    %v727 = vadd.f32 %v648, %v726
    %v728 = vpop.f32.mrb[0].mxu0
    %v729 = vpop.f32.mrb[0].mxu0
    %v730 = vadd.f32 %v651, %v729
    %v731 = vpop.f32.mrb[0].mxu0
    %732 = vdwg.mxu0
    %s733 = scalar_lea.vmem [#allocation7], 64
    %v734 = vld [vmem:[%s733] sm:$0xf]
    %v735 = vld [vmem:[%s733 + $0x4] sm:$0xf]
    %v736 = vld [vmem:[%s733 + $0x8] sm:$0xf]
    %v737 = vld [vmem:[%s733 + $0xc] sm:$0xf]
    %v738 = vld [vmem:[%s733 + $0x10] sm:$0xf]
    %v739 = vld [vmem:[%s733 + $0x14] sm:$0xf]
    %v740 = vld [vmem:[%s733 + $0x18] sm:$0xf]
    %v741 = vld [vmem:[%s733 + $0x1c] sm:$0xf]
    %v750 = vunpack.c.l.b16 %v734
    %v751 = vunpack.c.l.b16 %v735
    %v752 = vunpack.c.l.b16 %v736
    %v753 = vunpack.c.l.b16 %v737
    %v754 = vunpack.c.l.b16 %v738
    %v755 = vunpack.c.l.b16 %v739
    %v756 = vunpack.c.l.b16 %v740
    %v757 = vunpack.c.l.b16 %v741
    %v758 = vpack.c.b16 %v751, %v750
    %v759 = vpack.c.b16 %v753, %v752
    %v760 = vpack.c.b16 %v755, %v754
    %v761 = vpack.c.b16 %v757, %v756
    %v767 = vsel %vm225, %v556, 0
    %v770 = vsel %vm225, %v557, 0
    %772 = vmatprep.subr.bf16.mxu0 0
    %773 = vmatpush1.bf16.msra.mxu0 %v758
    %774 = vmatprep.subr.bf16.mxu0 0
    %775 = vmatpush1.bf16.msra.mxu0 %v759
    %776 = vmatprep.subr.bf16.mxu0 0
    %777 = vmatpush1.bf16.msra.mxu0 %v760
    %778 = vmatprep.subr.bf16.mxu0 0
    %779 = vmatpush1.bf16.msra.mxu0 %v761
    %780 = vmatprep.subr.bf16.mxu0 0
    %781 = vmatpush1.bf16.msra.mxu0 0
    %782 = vmatprep.subr.bf16.mxu0 0
    %783 = vmatpush1.bf16.msra.mxu0 0
    %784 = vmatprep.subr.bf16.mxu0 0
    %785 = vmatpush1.bf16.msra.mxu0 0
    %786 = vmatprep.subr.bf16.mxu0 0
    %787 = vmatpush1.bf16.msra.mxu0 0
    %788 = vmatprep.subr.bf16.mxu0 0
    %789 = vmatpush1.bf16.msra.mxu0 0
    %790 = vmatprep.subr.bf16.mxu0 0
    %791 = vmatpush1.bf16.msra.mxu0 0
    %792 = vmatprep.subr.bf16.mxu0 0
    %793 = vmatpush1.bf16.msra.mxu0 0
    %794 = vmatprep.subr.bf16.mxu0 0
    %795 = vmatpush1.bf16.msra.mxu0 0
    %796 = vmatprep.subr.bf16.mxu0 0
    %797 = vmatpush1.bf16.msra.mxu0 0
    %798 = vmatprep.subr.bf16.mxu0 0
    %799 = vmatpush1.bf16.msra.mxu0 0
    %800 = vmatprep.subr.bf16.mxu0 0
    %801 = vmatpush1.bf16.msra.mxu0 0
    %802 = vmatprep.subr.bf16.mxu0 0
    %803 = vmatpush1.bf16.msra.mxu0 0
    %804 = vmatprep.mubr.bf16.mxu0 0
    %805 = vmatmul.mubr.bf16.gmra.mrb[0].mxu0 %v767
    %v806 = vpop.f32.mrb[0].mxu0
    %v807 = vadd.f32 0.0, %v806
    %v808 = vpop.f32.mrb[0].mxu0
    %v809 = vpop.f32.mrb[0].mxu0
    %v810 = vadd.f32 0.0, %v809
    %v811 = vpop.f32.mrb[0].mxu0
    %812 = vmatprep.mubr.bf16.mxu0 0
    %813 = vmatmul.mubr.bf16.gmra.mrb[0].mxu0 %v770
    %v814 = vpop.f32.mrb[0].mxu0
    %v815 = vadd.f32 0.0, %v814
    %v816 = vpop.f32.mrb[0].mxu0
    %v817 = vpop.f32.mrb[0].mxu0
    %v818 = vadd.f32 0.0, %v817
    %v819 = vpop.f32.mrb[0].mxu0
    %820 = vdwg.mxu0
    %v821 = vadd.f32 %v719, %v807
    %v822 = vadd.f32 %v722, %v810
    %v823 = vadd.f32 %v727, %v815
    %v824 = vadd.f32 %v730, %v818
    %v825 = vld [vmem:[%s5] sm:$0x1]
    %v827 = vlaneseq
    %v828 = vshrl.u32 %v827, 7
    %v829 = vsub.s32 0, %v828
    %v830 = vrot.slane %v825, %v829
    %v832 = vadd.f32 %v821, %v830
    %v833 = vadd.f32 %v822, %v830
    %v834 = vadd.f32 %v823, %v830
    %v835 = vadd.f32 %v824, %v830
    %v836 = vld [vmem:[#allocation8] sm:$0xff]
    %v837 = vld [vmem:[#allocation8 + $0x8] sm:$0xff]
    %v838 = vld [vmem:[#allocation8 + $0x10] sm:$0xff]
    %v839 = vld [vmem:[#allocation8 + $0x18] sm:$0xff]
    %v840 = vld [vmem:[#allocation8 + $0x20] sm:$0xff]
    %v841 = vld [vmem:[#allocation8 + $0x28] sm:$0xff]
    %v842 = vld [vmem:[#allocation8 + $0x30] sm:$0xff]
    %v843 = vld [vmem:[#allocation8 + $0x38] sm:$0xff]
    %v844 = vld [vmem:[#allocation8 + $0x40] sm:$0xff]
    %v845 = vld [vmem:[#allocation8 + $0x48] sm:$0xff]
    %v846 = vld [vmem:[#allocation8 + $0x50] sm:$0xff]
    %v847 = vld [vmem:[#allocation8 + $0x58] sm:$0xff]
    %v848 = vld [vmem:[#allocation8 + $0x60] sm:$0xff]
    %v849 = vld [vmem:[#allocation8 + $0x68] sm:$0xff]
    %v850 = vld [vmem:[#allocation8 + $0x70] sm:$0xff]
    %v851 = vld [vmem:[#allocation8 + $0x78] sm:$0xff]
    %v852 = vadd.f32 %v832, %v833
    %v853 = vadd.f32 %v852, %v834
    %v854 = vadd.f32 %v853, %v835
    %v855 = vrot.slane %v854, 4
    %v856 = vadd.f32 %v854, %v855
    %v857 = vrot.slane %v856, 2
    %v858 = vadd.f32 %v856, %v857
    %v859 = vrot.slane %v858, 1
    %v860 = vadd.f32 %v858, %v859
    %861 = vmatprep.subr.mxu0 0.0
    %862 = vmatpush1.msra.mxu0 %v836
    %863 = vmatprep.subr.mxu0 0.0
    %864 = vmatpush1.msra.mxu0 %v837
    %865 = vmatprep.subr.mxu0 0.0
    %866 = vmatpush1.msra.mxu0 %v838
    %867 = vmatprep.subr.mxu0 0.0
    %868 = vmatpush1.msra.mxu0 %v839
    %869 = vmatprep.subr.mxu0 0.0
    %870 = vmatpush1.msra.mxu0 %v840
    %871 = vmatprep.subr.mxu0 0.0
    %872 = vmatpush1.msra.mxu0 %v841
    %873 = vmatprep.subr.mxu0 0.0
    %874 = vmatpush1.msra.mxu0 %v842
    %875 = vmatprep.subr.mxu0 0.0
    %876 = vmatpush1.msra.mxu0 %v843
    %877 = vmatprep.subr.mxu0 0.0
    %878 = vmatpush1.msra.mxu0 %v844
    %879 = vmatprep.subr.mxu0 0.0
    %880 = vmatpush1.msra.mxu0 %v845
    %881 = vmatprep.subr.mxu0 0.0
    %882 = vmatpush1.msra.mxu0 %v846
    %883 = vmatprep.subr.mxu0 0.0
    %884 = vmatpush1.msra.mxu0 %v847
    %885 = vmatprep.subr.mxu0 0.0
    %886 = vmatpush1.msra.mxu0 %v848
    %887 = vmatprep.subr.mxu0 0.0
    %888 = vmatpush1.msra.mxu0 %v849
    %889 = vmatprep.subr.mxu0 0.0
    %890 = vmatpush1.msra.mxu0 %v850
    %891 = vmatprep.subr.mxu0 0.0
    %892 = vmatpush1.msra.mxu0 %v851
    %893 = vmatprep.subr.mxu0 0.0
    %894 = vmatpush1.msra.mxu0 0.0
    %895 = vmatprep.subr.mxu0 0.0
    %896 = vmatpush1.msra.mxu0 0.0
    %897 = vmatprep.subr.mxu0 0.0
    %898 = vmatpush1.msra.mxu0 0.0
    %899 = vmatprep.subr.mxu0 0.0
    %900 = vmatpush1.msra.mxu0 0.0
    %901 = vmatprep.subr.mxu0 0.0
    %902 = vmatpush1.msra.mxu0 0.0
    %903 = vmatprep.subr.mxu0 0.0
    %904 = vmatpush1.msra.mxu0 0.0
    %905 = vmatprep.subr.mxu0 0.0
    %906 = vmatpush1.msra.mxu0 0.0
    %907 = vmatprep.subr.mxu0 0.0
    %908 = vmatpush1.msra.mxu0 0.0
    %909 = vmatprep.subr.mxu0 0.0
    %910 = vmatpush1.msra.mxu0 0.0
    %911 = vmatprep.subr.mxu0 0.0
    %912 = vmatpush1.msra.mxu0 0.0
    %913 = vmatprep.subr.mxu0 0.0
    %914 = vmatpush1.msra.mxu0 0.0
    %915 = vmatprep.subr.mxu0 0.0
    %916 = vmatpush1.msra.mxu0 0.0
    %917 = vmatprep.subr.mxu0 0.0
    %918 = vmatpush1.msra.mxu0 0.0
    %919 = vmatprep.subr.mxu0 0.0
    %920 = vmatpush1.msra.mxu0 0.0
    %921 = vmatprep.subr.mxu0 0.0
    %922 = vmatpush1.msra.mxu0 0.0
    %923 = vmatprep.subr.mxu0 0.0
    %924 = vmatpush1.msra.mxu0 0.0
    %925 = vmatprep.mubr.f32.mxu0 0.0
    %926 = vmatmul.mubr.f32.gmra.mrb[0].mxu0 %v860
    %v927 = vpop.f32.mrb[0].mxu0
    %v928 = vadd.f32 0.0, %v927
    %v929 = vpop.f32.mrb[0].mxu0
    %930 = vdwg.mxu0
    %v931 = vmul.f32 %v928, 0.001953125
    %v932 = vlaneseq
    %v933 = vshrl.u32 %v932, 7
    %v934 = vsub.s32 0, %v933
    %v935 = vrot.slane %v931, %v934
    %v936 = vsub.f32 %v832, %v935
    %v937 = vsub.f32 %v833, %v935
    %v938 = vsub.f32 %v834, %v935
    %v939 = vsub.f32 %v835, %v935
    %v940 = vmul.f32 %v936, %v936
    %v941 = vmul.f32 %v937, %v937
    %v942 = vmul.f32 %v938, %v938
    %v943 = vmul.f32 %v939, %v939
    %v944 = vadd.f32 %v940, %v941
    %v945 = vadd.f32 %v944, %v942
    %v946 = vadd.f32 %v945, %v943
    %v947 = vrot.slane %v946, 4
    %v948 = vadd.f32 %v946, %v947
    %v949 = vrot.slane %v948, 2
    %v950 = vadd.f32 %v948, %v949
    %v951 = vrot.slane %v950, 1
    %v952 = vadd.f32 %v950, %v951
    %953 = vmatprep.subr.mxu0 0.0
    %954 = vmatpush1.msra.mxu0 %v836
    %955 = vmatprep.subr.mxu0 0.0
    %956 = vmatpush1.msra.mxu0 %v837
    %957 = vmatprep.subr.mxu0 0.0
    %958 = vmatpush1.msra.mxu0 %v838
    %959 = vmatprep.subr.mxu0 0.0
    %960 = vmatpush1.msra.mxu0 %v839
    %961 = vmatprep.subr.mxu0 0.0
    %962 = vmatpush1.msra.mxu0 %v840
    %963 = vmatprep.subr.mxu0 0.0
    %964 = vmatpush1.msra.mxu0 %v841
    %965 = vmatprep.subr.mxu0 0.0
    %966 = vmatpush1.msra.mxu0 %v842
    %967 = vmatprep.subr.mxu0 0.0
    %968 = vmatpush1.msra.mxu0 %v843
    %969 = vmatprep.subr.mxu0 0.0
    %970 = vmatpush1.msra.mxu0 %v844
    %971 = vmatprep.subr.mxu0 0.0
    %972 = vmatpush1.msra.mxu0 %v845
    %973 = vmatprep.subr.mxu0 0.0
    %974 = vmatpush1.msra.mxu0 %v846
    %975 = vmatprep.subr.mxu0 0.0
    %976 = vmatpush1.msra.mxu0 %v847
    %977 = vmatprep.subr.mxu0 0.0
    %978 = vmatpush1.msra.mxu0 %v848
    %979 = vmatprep.subr.mxu0 0.0
    %980 = vmatpush1.msra.mxu0 %v849
    %981 = vmatprep.subr.mxu0 0.0
    %982 = vmatpush1.msra.mxu0 %v850
    %983 = vmatprep.subr.mxu0 0.0
    %984 = vmatpush1.msra.mxu0 %v851
    %985 = vmatprep.subr.mxu0 0.0
    %986 = vmatpush1.msra.mxu0 0.0
    %987 = vmatprep.subr.mxu0 0.0
    %988 = vmatpush1.msra.mxu0 0.0
    %989 = vmatprep.subr.mxu0 0.0
    %990 = vmatpush1.msra.mxu0 0.0
    %991 = vmatprep.subr.mxu0 0.0
    %992 = vmatpush1.msra.mxu0 0.0
    %993 = vmatprep.subr.mxu0 0.0
    %994 = vmatpush1.msra.mxu0 0.0
    %995 = vmatprep.subr.mxu0 0.0
    %996 = vmatpush1.msra.mxu0 0.0
    %997 = vmatprep.subr.mxu0 0.0
    %998 = vmatpush1.msra.mxu0 0.0
    %999 = vmatprep.subr.mxu0 0.0
    %1000 = vmatpush1.msra.mxu0 0.0
    %1001 = vmatprep.subr.mxu0 0.0
    %1002 = vmatpush1.msra.mxu0 0.0
    %1003 = vmatprep.subr.mxu0 0.0
    %1004 = vmatpush1.msra.mxu0 0.0
    %1005 = vmatprep.subr.mxu0 0.0
    %1006 = vmatpush1.msra.mxu0 0.0
    %1007 = vmatprep.subr.mxu0 0.0
    %1008 = vmatpush1.msra.mxu0 0.0
    %1009 = vmatprep.subr.mxu0 0.0
    %1010 = vmatpush1.msra.mxu0 0.0
    %1011 = vmatprep.subr.mxu0 0.0
    %1012 = vmatpush1.msra.mxu0 0.0
    %1013 = vmatprep.subr.mxu0 0.0
    %1014 = vmatpush1.msra.mxu0 0.0
    %1015 = vmatprep.subr.mxu0 0.0
    %1016 = vmatpush1.msra.mxu0 0.0
    %1017 = vmatprep.mubr.f32.mxu0 0.0
    %1018 = vmatmul.mubr.f32.gmra.mrb[0].mxu0 %v952
    %v1019 = vpop.f32.mrb[0].mxu0
    %v1020 = vadd.f32 0.0, %v1019
    %v1021 = vpop.f32.mrb[0].mxu0
    %1022 = vdwg.mxu0
    %v1023 = vmul.f32 %v1020, 0.001953125
    %v1024 = vld [vmem:[%s6] sm:$0x1]
    %v1025 = vadd.f32 %v1023, 1e-05
    %v1026 = vrsqrt.pop %v1025
    %v1027 = vmul.f32 %v1024, %v1026
    %v1029 = vlaneseq
    %v1030 = vshrl.u32 %v1029, 7
    %v1031 = vsub.s32 0, %v1030
    %v1032 = vrot.slane %v1027, %v1031
    %v1034 = vmul.f32 %v936, %v1032
    %v1035 = vmul.f32 %v937, %v1032
    %v1036 = vmul.f32 %v938, %v1032
    %v1037 = vmul.f32 %v939, %v1032
    %v1038 = vld [vmem:[%s7] sm:$0x1]
    %v1040 = vlaneseq
    %v1041 = vshrl.u32 %v1040, 7
    %v1042 = vsub.s32 0, %v1041
    %v1043 = vrot.slane %v1038, %v1042
    %v1045 = vadd.f32 %v1034, %v1043
    %v1046 = vadd.f32 %v1035, %v1043
    %v1047 = vadd.f32 %v1036, %v1043
    %v1048 = vadd.f32 %v1037, %v1043
    %v1049 = vmax.f32 %v1045, 0.0
    %v1050 = vmax.f32 %v1046, 0.0
    %v1051 = vmax.f32 %v1047, 0.0
    %v1052 = vmax.f32 %v1048, 0.0
    %v1053 = vpack.c.bf16 %v1050, %v1049
    %v1054 = vpack.c.bf16 %v1052, %v1051
    %1055 = vmatprep.subr.bf16.mxu0 0
    %1056 = vmatpush1.bf16.msra.mxu0 %v1053
    %1057 = vmatprep.subr.bf16.mxu0 0
    %1058 = vmatpush1.bf16.msra.mxu0 %v1054
    %1059 = vmatprep.subr.bf16.mxu0 0
    %1060 = vmatpush1.bf16.msra.mxu0 0
    %1061 = vmatprep.subr.bf16.mxu0 0
    %1062 = vmatpush1.bf16.msra.mxu0 0
    %1063 = vmatprep.subr.bf16.mxu0 0
    %1064 = vmatpush1.bf16.msra.mxu0 0
    %1065 = vmatprep.subr.bf16.mxu0 0
    %1066 = vmatpush1.bf16.msra.mxu0 0
    %1067 = vmatprep.subr.bf16.mxu0 0
    %1068 = vmatpush1.bf16.msra.mxu0 0
    %1069 = vmatprep.subr.bf16.mxu0 0
    %1070 = vmatpush1.bf16.msra.mxu0 0
    %1071 = vmatprep.subr.bf16.mxu0 0
    %1072 = vmatpush1.bf16.msra.mxu0 0
    %1073 = vmatprep.subr.bf16.mxu0 0
    %1074 = vmatpush1.bf16.msra.mxu0 0
    %1075 = vmatprep.subr.bf16.mxu0 0
    %1076 = vmatpush1.bf16.msra.mxu0 0
    %1077 = vmatprep.subr.bf16.mxu0 0
    %1078 = vmatpush1.bf16.msra.mxu0 0
    %1079 = vmatprep.subr.bf16.mxu0 0
    %1080 = vmatpush1.bf16.msra.mxu0 0
    %1081 = vmatprep.subr.bf16.mxu0 0
    %1082 = vmatpush1.bf16.msra.mxu0 0
    %1083 = vmatprep.subr.bf16.mxu0 0
    %1084 = vmatpush1.bf16.msra.mxu0 0
    %1085 = vmatprep.subr.bf16.mxu0 0
    %1086 = vmatpush1.bf16.msra.mxu0 0
    %1087 = vmatprep.mubr.bf16.mxu0 0
    %1088 = vmatmul.mubr.bf16.gmra.mrb[0].mxu0 %v445
    %v1089 = vpop.f32.mrb[0].mxu0
    %v1090 = vadd.f32 0.0, %v1089
    %v1091 = vpop.f32.mrb[0].mxu0
    %v1092 = vpop.f32.mrb[0].mxu0
    %v1093 = vadd.f32 0.0, %v1092
    %v1094 = vpop.f32.mrb[0].mxu0
    %1095 = vmatprep.mubr.bf16.mxu0 0
    %1096 = vmatmul.mubr.bf16.gmra.mrb[0].mxu0 %v448
    %v1097 = vpop.f32.mrb[0].mxu0
    %v1098 = vadd.f32 0.0, %v1097
    %v1099 = vpop.f32.mrb[0].mxu0
    %v1100 = vpop.f32.mrb[0].mxu0
    %v1101 = vadd.f32 0.0, %v1100
    %v1102 = vpop.f32.mrb[0].mxu0
    %1103 = vdwg.mxu0
    %v1104 = vpack.c.bf16 %v1093, %v1090
    %v1105 = vpack.c.bf16 %v1101, %v1098
    %1106 = vmatprep.subr.bf16.mxu0 0
    %1107 = vmatpush1.bf16.msra.mxu0 %v1053
    %1108 = vmatprep.subr.bf16.mxu0 0
    %1109 = vmatpush1.bf16.msra.mxu0 %v1054
    %1110 = vmatprep.subr.bf16.mxu0 0
    %1111 = vmatpush1.bf16.msra.mxu0 0
    %1112 = vmatprep.subr.bf16.mxu0 0
    %1113 = vmatpush1.bf16.msra.mxu0 0
    %1114 = vmatprep.subr.bf16.mxu0 0
    %1115 = vmatpush1.bf16.msra.mxu0 0
    %1116 = vmatprep.subr.bf16.mxu0 0
    %1117 = vmatpush1.bf16.msra.mxu0 0
    %1118 = vmatprep.subr.bf16.mxu0 0
    %1119 = vmatpush1.bf16.msra.mxu0 0
    %1120 = vmatprep.subr.bf16.mxu0 0
    %1121 = vmatpush1.bf16.msra.mxu0 0
    %1122 = vmatprep.subr.bf16.mxu0 0
    %1123 = vmatpush1.bf16.msra.mxu0 0
    %1124 = vmatprep.subr.bf16.mxu0 0
    %1125 = vmatpush1.bf16.msra.mxu0 0
    %1126 = vmatprep.subr.bf16.mxu0 0
    %1127 = vmatpush1.bf16.msra.mxu0 0
    %1128 = vmatprep.subr.bf16.mxu0 0
    %1129 = vmatpush1.bf16.msra.mxu0 0
    %1130 = vmatprep.subr.bf16.mxu0 0
    %1131 = vmatpush1.bf16.msra.mxu0 0
    %1132 = vmatprep.subr.bf16.mxu0 0
    %1133 = vmatpush1.bf16.msra.mxu0 0
    %1134 = vmatprep.subr.bf16.mxu0 0
    %1135 = vmatpush1.bf16.msra.mxu0 0
    %1136 = vmatprep.subr.bf16.mxu0 0
    %1137 = vmatpush1.bf16.msra.mxu0 0
    %1138 = vmatprep.mubr.bf16.mxu0 0
    %1139 = vmatmul.mubr.bf16.gmra.mrb[0].mxu0 %v502
    %v1140 = vpop.f32.mrb[0].mxu0
    %v1141 = vadd.f32 0.0, %v1140
    %v1142 = vpop.f32.mrb[0].mxu0
    %v1143 = vpop.f32.mrb[0].mxu0
    %v1144 = vadd.f32 0.0, %v1143
    %v1145 = vpop.f32.mrb[0].mxu0
    %1146 = vmatprep.mubr.bf16.mxu0 0
    %1147 = vmatmul.mubr.bf16.gmra.mrb[0].mxu0 %v505
    %v1148 = vpop.f32.mrb[0].mxu0
    %v1149 = vadd.f32 0.0, %v1148
    %v1150 = vpop.f32.mrb[0].mxu0
    %v1151 = vpop.f32.mrb[0].mxu0
    %v1152 = vadd.f32 0.0, %v1151
    %v1153 = vpop.f32.mrb[0].mxu0
    %1154 = vdwg.mxu0
    %v1155 = vpack.c.bf16 %v1144, %v1141
    %v1156 = vpack.c.bf16 %v1152, %v1149
    %v1157 = vld [vmem:[#allocation10] sm:$0xf]
    %v1158 = vld [vmem:[#allocation10 + $0x4] sm:$0xf]
    %v1159 = vld [vmem:[#allocation10 + $0x8] sm:$0xf]
    %v1160 = vld [vmem:[#allocation10 + $0xc] sm:$0xf]
    %v1161 = vld [vmem:[#allocation10 + $0x10] sm:$0xf]
    %v1162 = vld [vmem:[#allocation10 + $0x14] sm:$0xf]
    %v1163 = vld [vmem:[#allocation10 + $0x18] sm:$0xf]
    %v1164 = vld [vmem:[#allocation10 + $0x1c] sm:$0xf]
    %v1165 = vld [vmem:[#allocation10 + $0x20] sm:$0xf]
    %v1166 = vld [vmem:[#allocation10 + $0x24] sm:$0xf]
    %v1167 = vld [vmem:[#allocation10 + $0x28] sm:$0xf]
    %v1168 = vld [vmem:[#allocation10 + $0x2c] sm:$0xf]
    %v1169 = vld [vmem:[#allocation10 + $0x30] sm:$0xf]
    %v1170 = vld [vmem:[#allocation10 + $0x34] sm:$0xf]
    %v1171 = vld [vmem:[#allocation10 + $0x38] sm:$0xf]
    %v1172 = vld [vmem:[#allocation10 + $0x3c] sm:$0xf]
    %s1173 = scalar_lea.vmem [#allocation10], 64
    %v1174 = vld [vmem:[%s1173] sm:$0xf]
    %v1175 = vld [vmem:[%s1173 + $0x4] sm:$0xf]
    %v1176 = vld [vmem:[%s1173 + $0x8] sm:$0xf]
    %v1177 = vld [vmem:[%s1173 + $0xc] sm:$0xf]
    %v1178 = vld [vmem:[%s1173 + $0x10] sm:$0xf]
    %v1179 = vld [vmem:[%s1173 + $0x14] sm:$0xf]
    %v1180 = vld [vmem:[%s1173 + $0x18] sm:$0xf]
    %v1181 = vld [vmem:[%s1173 + $0x1c] sm:$0xf]
    %v1182 = vld [vmem:[%s1173 + $0x20] sm:$0xf]
    %v1183 = vld [vmem:[%s1173 + $0x24] sm:$0xf]
    %v1184 = vld [vmem:[%s1173 + $0x28] sm:$0xf]
    %v1185 = vld [vmem:[%s1173 + $0x2c] sm:$0xf]
    %v1186 = vld [vmem:[%s1173 + $0x30] sm:$0xf]
    %v1187 = vld [vmem:[%s1173 + $0x34] sm:$0xf]
    %v1188 = vld [vmem:[%s1173 + $0x38] sm:$0xf]
    %v1189 = vld [vmem:[%s1173 + $0x3c] sm:$0xf]
    %v1206 = vunpack.c.l.b16 %v1174
    %v1207 = vunpack.c.l.b16 %v1175
    %v1208 = vunpack.c.l.b16 %v1176
    %v1209 = vunpack.c.l.b16 %v1177
    %v1210 = vunpack.c.l.b16 %v1178
    %v1211 = vunpack.c.l.b16 %v1179
    %v1212 = vunpack.c.l.b16 %v1180
    %v1213 = vunpack.c.l.b16 %v1181
    %v1214 = vunpack.c.l.b16 %v1182
    %v1215 = vunpack.c.l.b16 %v1183
    %v1216 = vunpack.c.l.b16 %v1184
    %v1217 = vunpack.c.l.b16 %v1185
    %v1218 = vunpack.c.l.b16 %v1186
    %v1219 = vunpack.c.l.b16 %v1187
    %v1220 = vunpack.c.l.b16 %v1188
    %v1221 = vunpack.c.l.b16 %v1189
    %v1222 = vpack.c.b16 %v1207, %v1206
    %v1223 = vpack.c.b16 %v1209, %v1208
    %v1224 = vpack.c.b16 %v1211, %v1210
    %v1225 = vpack.c.b16 %v1213, %v1212
    %v1226 = vpack.c.b16 %v1215, %v1214
    %v1227 = vpack.c.b16 %v1217, %v1216
    %v1228 = vpack.c.b16 %v1219, %v1218
    %v1229 = vpack.c.b16 %v1221, %v1220
    %1238 = vmatprep.subr.bf16.mxu0 0
    %1239 = vmatpush1.bf16.msra.mxu0 %v1222
    %1240 = vmatprep.subr.bf16.mxu0 0
    %1241 = vmatpush1.bf16.msra.mxu0 %v1223
    %1242 = vmatprep.subr.bf16.mxu0 0
    %1243 = vmatpush1.bf16.msra.mxu0 %v1224
    %1244 = vmatprep.subr.bf16.mxu0 0
    %1245 = vmatpush1.bf16.msra.mxu0 %v1225
    %1246 = vmatprep.subr.bf16.mxu0 0
    %1247 = vmatpush1.bf16.msra.mxu0 %v1226
    %1248 = vmatprep.subr.bf16.mxu0 0
    %1249 = vmatpush1.bf16.msra.mxu0 %v1227
    %1250 = vmatprep.subr.bf16.mxu0 0
    %1251 = vmatpush1.bf16.msra.mxu0 %v1228
    %1252 = vmatprep.subr.bf16.mxu0 0
    %1253 = vmatpush1.bf16.msra.mxu0 %v1229
    %1254 = vmatprep.subr.bf16.mxu0 0
    %1255 = vmatpush1.bf16.msra.mxu0 0
    %1256 = vmatprep.subr.bf16.mxu0 0
    %1257 = vmatpush1.bf16.msra.mxu0 0
    %1258 = vmatprep.subr.bf16.mxu0 0
    %1259 = vmatpush1.bf16.msra.mxu0 0
    %1260 = vmatprep.subr.bf16.mxu0 0
    %1261 = vmatpush1.bf16.msra.mxu0 0
    %1262 = vmatprep.subr.bf16.mxu0 0
    %1263 = vmatpush1.bf16.msra.mxu0 0
    %1264 = vmatprep.subr.bf16.mxu0 0
    %1265 = vmatpush1.bf16.msra.mxu0 0
    %1266 = vmatprep.subr.bf16.mxu0 0
    %1267 = vmatpush1.bf16.msra.mxu0 0
    %1268 = vmatprep.subr.bf16.mxu0 0
    %1269 = vmatpush1.bf16.msra.mxu0 0
    %1270 = vmatprep.mubr.bf16.mxu0 0
    %1271 = vmatmul.mubr.bf16.gmra.mrb[0].mxu0 %v1053
    %v1272 = vpop.f32.mrb[0].mxu0
    %v1273 = vadd.f32 0.0, %v1272
    %v1274 = vpop.f32.mrb[0].mxu0
    %v1275 = vpop.f32.mrb[0].mxu0
    %v1276 = vadd.f32 0.0, %v1275
    %v1277 = vpop.f32.mrb[0].mxu0
    %1278 = vmatprep.mubr.bf16.mxu0 0
    %1279 = vmatmul.mubr.bf16.gmra.mrb[0].mxu0 %v1054
    %v1280 = vpop.f32.mrb[0].mxu0
    %v1281 = vadd.f32 0.0, %v1280
    %v1282 = vpop.f32.mrb[0].mxu0
    %v1283 = vpop.f32.mrb[0].mxu0
    %v1284 = vadd.f32 0.0, %v1283
    %v1285 = vpop.f32.mrb[0].mxu0
    %1286 = vdwg.mxu0
    %v1303 = vunpack.c.l.b16 %v1157
    %v1304 = vunpack.c.l.b16 %v1158
    %v1305 = vunpack.c.l.b16 %v1159
    %v1306 = vunpack.c.l.b16 %v1160
    %v1307 = vunpack.c.l.b16 %v1161
    %v1308 = vunpack.c.l.b16 %v1162
    %v1309 = vunpack.c.l.b16 %v1163
    %v1310 = vunpack.c.l.b16 %v1164
    %v1311 = vunpack.c.l.b16 %v1165
    %v1312 = vunpack.c.l.b16 %v1166
    %v1313 = vunpack.c.l.b16 %v1167
    %v1314 = vunpack.c.l.b16 %v1168
    %v1315 = vunpack.c.l.b16 %v1169
    %v1316 = vunpack.c.l.b16 %v1170
    %v1317 = vunpack.c.l.b16 %v1171
    %v1318 = vunpack.c.l.b16 %v1172
    %v1319 = vpack.c.b16 %v1304, %v1303
    %v1320 = vpack.c.b16 %v1306, %v1305
    %v1321 = vpack.c.b16 %v1308, %v1307
    %v1322 = vpack.c.b16 %v1310, %v1309
    %v1323 = vpack.c.b16 %v1312, %v1311
    %v1324 = vpack.c.b16 %v1314, %v1313
    %v1325 = vpack.c.b16 %v1316, %v1315
    %v1326 = vpack.c.b16 %v1318, %v1317
    %1335 = vmatprep.subr.bf16.mxu0 0
    %1336 = vmatpush1.bf16.msra.mxu0 %v1319
    %1337 = vmatprep.subr.bf16.mxu0 0
    %1338 = vmatpush1.bf16.msra.mxu0 %v1320
    %1339 = vmatprep.subr.bf16.mxu0 0
    %1340 = vmatpush1.bf16.msra.mxu0 %v1321
    %1341 = vmatprep.subr.bf16.mxu0 0
    %1342 = vmatpush1.bf16.msra.mxu0 %v1322
    %1343 = vmatprep.subr.bf16.mxu0 0
    %1344 = vmatpush1.bf16.msra.mxu0 %v1323
    %1345 = vmatprep.subr.bf16.mxu0 0
    %1346 = vmatpush1.bf16.msra.mxu0 %v1324
    %1347 = vmatprep.subr.bf16.mxu0 0
    %1348 = vmatpush1.bf16.msra.mxu0 %v1325
    %1349 = vmatprep.subr.bf16.mxu0 0
    %1350 = vmatpush1.bf16.msra.mxu0 %v1326
    %1351 = vmatprep.subr.bf16.mxu0 0
    %1352 = vmatpush1.bf16.msra.mxu0 0
    %1353 = vmatprep.subr.bf16.mxu0 0
    %1354 = vmatpush1.bf16.msra.mxu0 0
    %1355 = vmatprep.subr.bf16.mxu0 0
    %1356 = vmatpush1.bf16.msra.mxu0 0
    %1357 = vmatprep.subr.bf16.mxu0 0
    %1358 = vmatpush1.bf16.msra.mxu0 0
    %1359 = vmatprep.subr.bf16.mxu0 0
    %1360 = vmatpush1.bf16.msra.mxu0 0
    %1361 = vmatprep.subr.bf16.mxu0 0
    %1362 = vmatpush1.bf16.msra.mxu0 0
    %1363 = vmatprep.subr.bf16.mxu0 0
    %1364 = vmatpush1.bf16.msra.mxu0 0
    %1365 = vmatprep.subr.bf16.mxu0 0
    %1366 = vmatpush1.bf16.msra.mxu0 0
    %1367 = vmatprep.mubr.bf16.mxu0 0
    %1368 = vmatmul.mubr.bf16.gmra.mrb[0].mxu0 %v1104
    %v1369 = vpop.f32.mrb[0].mxu0
    %v1370 = vadd.f32 %v1273, %v1369
    %v1371 = vpop.f32.mrb[0].mxu0
    %v1372 = vpop.f32.mrb[0].mxu0
    %v1373 = vadd.f32 %v1276, %v1372
    %v1374 = vpop.f32.mrb[0].mxu0
    %1375 = vmatprep.mubr.bf16.mxu0 0
    %1376 = vmatmul.mubr.bf16.gmra.mrb[0].mxu0 %v1105
    %v1377 = vpop.f32.mrb[0].mxu0
    %v1378 = vadd.f32 %v1281, %v1377
    %v1379 = vpop.f32.mrb[0].mxu0
    %v1380 = vpop.f32.mrb[0].mxu0
    %v1381 = vadd.f32 %v1284, %v1380
    %v1382 = vpop.f32.mrb[0].mxu0
    %1383 = vdwg.mxu0
    %s1384 = scalar_lea.vmem [#allocation10], 128
    %v1385 = vld [vmem:[%s1384] sm:$0xf]
    %v1386 = vld [vmem:[%s1384 + $0x4] sm:$0xf]
    %v1387 = vld [vmem:[%s1384 + $0x8] sm:$0xf]
    %v1388 = vld [vmem:[%s1384 + $0xc] sm:$0xf]
    %v1389 = vld [vmem:[%s1384 + $0x10] sm:$0xf]
    %v1390 = vld [vmem:[%s1384 + $0x14] sm:$0xf]
    %v1391 = vld [vmem:[%s1384 + $0x18] sm:$0xf]
    %v1392 = vld [vmem:[%s1384 + $0x1c] sm:$0xf]
    %v1393 = vld [vmem:[%s1384 + $0x20] sm:$0xf]
    %v1394 = vld [vmem:[%s1384 + $0x24] sm:$0xf]
    %v1395 = vld [vmem:[%s1384 + $0x28] sm:$0xf]
    %v1396 = vld [vmem:[%s1384 + $0x2c] sm:$0xf]
    %v1397 = vld [vmem:[%s1384 + $0x30] sm:$0xf]
    %v1398 = vld [vmem:[%s1384 + $0x34] sm:$0xf]
    %v1399 = vld [vmem:[%s1384 + $0x38] sm:$0xf]
    %v1400 = vld [vmem:[%s1384 + $0x3c] sm:$0xf]
    %v1417 = vunpack.c.l.b16 %v1385
    %v1418 = vunpack.c.l.b16 %v1386
    %v1419 = vunpack.c.l.b16 %v1387
    %v1420 = vunpack.c.l.b16 %v1388
    %v1421 = vunpack.c.l.b16 %v1389
    %v1422 = vunpack.c.l.b16 %v1390
    %v1423 = vunpack.c.l.b16 %v1391
    %v1424 = vunpack.c.l.b16 %v1392
    %v1425 = vunpack.c.l.b16 %v1393
    %v1426 = vunpack.c.l.b16 %v1394
    %v1427 = vunpack.c.l.b16 %v1395
    %v1428 = vunpack.c.l.b16 %v1396
    %v1429 = vunpack.c.l.b16 %v1397
    %v1430 = vunpack.c.l.b16 %v1398
    %v1431 = vunpack.c.l.b16 %v1399
    %v1432 = vunpack.c.l.b16 %v1400
    %v1433 = vpack.c.b16 %v1418, %v1417
    %v1434 = vpack.c.b16 %v1420, %v1419
    %v1435 = vpack.c.b16 %v1422, %v1421
    %v1436 = vpack.c.b16 %v1424, %v1423
    %v1437 = vpack.c.b16 %v1426, %v1425
    %v1438 = vpack.c.b16 %v1428, %v1427
    %v1439 = vpack.c.b16 %v1430, %v1429
    %v1440 = vpack.c.b16 %v1432, %v1431
    %1449 = vmatprep.subr.bf16.mxu0 0
    %1450 = vmatpush1.bf16.msra.mxu0 %v1433
    %1451 = vmatprep.subr.bf16.mxu0 0
    %1452 = vmatpush1.bf16.msra.mxu0 %v1434
    %1453 = vmatprep.subr.bf16.mxu0 0
    %1454 = vmatpush1.bf16.msra.mxu0 %v1435
    %1455 = vmatprep.subr.bf16.mxu0 0
    %1456 = vmatpush1.bf16.msra.mxu0 %v1436
    %1457 = vmatprep.subr.bf16.mxu0 0
    %1458 = vmatpush1.bf16.msra.mxu0 %v1437
    %1459 = vmatprep.subr.bf16.mxu0 0
    %1460 = vmatpush1.bf16.msra.mxu0 %v1438
    %1461 = vmatprep.subr.bf16.mxu0 0
    %1462 = vmatpush1.bf16.msra.mxu0 %v1439
    %1463 = vmatprep.subr.bf16.mxu0 0
    %1464 = vmatpush1.bf16.msra.mxu0 %v1440
    %1465 = vmatprep.subr.bf16.mxu0 0
    %1466 = vmatpush1.bf16.msra.mxu0 0
    %1467 = vmatprep.subr.bf16.mxu0 0
    %1468 = vmatpush1.bf16.msra.mxu0 0
    %1469 = vmatprep.subr.bf16.mxu0 0
    %1470 = vmatpush1.bf16.msra.mxu0 0
    %1471 = vmatprep.subr.bf16.mxu0 0
    %1472 = vmatpush1.bf16.msra.mxu0 0
    %1473 = vmatprep.subr.bf16.mxu0 0
    %1474 = vmatpush1.bf16.msra.mxu0 0
    %1475 = vmatprep.subr.bf16.mxu0 0
    %1476 = vmatpush1.bf16.msra.mxu0 0
    %1477 = vmatprep.subr.bf16.mxu0 0
    %1478 = vmatpush1.bf16.msra.mxu0 0
    %1479 = vmatprep.subr.bf16.mxu0 0
    %1480 = vmatpush1.bf16.msra.mxu0 0
    %1481 = vmatprep.mubr.bf16.mxu0 0
    %1482 = vmatmul.mubr.bf16.gmra.mrb[0].mxu0 %v1155
    %v1483 = vpop.f32.mrb[0].mxu0
    %v1484 = vadd.f32 0.0, %v1483
    %v1485 = vpop.f32.mrb[0].mxu0
    %v1486 = vpop.f32.mrb[0].mxu0
    %v1487 = vadd.f32 0.0, %v1486
    %v1488 = vpop.f32.mrb[0].mxu0
    %1489 = vmatprep.mubr.bf16.mxu0 0
    %1490 = vmatmul.mubr.bf16.gmra.mrb[0].mxu0 %v1156
    %v1491 = vpop.f32.mrb[0].mxu0
    %v1492 = vadd.f32 0.0, %v1491
    %v1493 = vpop.f32.mrb[0].mxu0
    %v1494 = vpop.f32.mrb[0].mxu0
    %v1495 = vadd.f32 0.0, %v1494
    %v1496 = vpop.f32.mrb[0].mxu0
    %1497 = vdwg.mxu0
    %v1498 = vadd.f32 %v1370, %v1484
    %v1499 = vadd.f32 %v1373, %v1487
    %v1500 = vadd.f32 %v1378, %v1492
    %v1501 = vadd.f32 %v1381, %v1495
    %v1502 = vld [vmem:[%s10] sm:$0x1]
    %v1504 = vlaneseq
    %v1505 = vshrl.u32 %v1504, 7
    %v1506 = vsub.s32 0, %v1505
    %v1507 = vrot.slane %v1502, %v1506
    %v1509 = vadd.f32 %v1498, %v1507
    %v1510 = vadd.f32 %v1499, %v1507
    %v1511 = vadd.f32 %v1500, %v1507
    %v1512 = vadd.f32 %v1501, %v1507
    %v1513 = vpack.c.bf16 %v115, %v114
    %v1514 = vpack.c.bf16 %v117, %v116
    %v1515 = vld [vmem:[%s11] sm:$0xf]
    %v1516 = vld [vmem:[%s11 + $0x4] sm:$0xf]
    %v1517 = vld [vmem:[%s11 + $0x8] sm:$0xf]
    %v1518 = vld [vmem:[%s11 + $0xc] sm:$0xf]
    %v1519 = vld [vmem:[%s11 + $0x10] sm:$0xf]
    %v1520 = vld [vmem:[%s11 + $0x14] sm:$0xf]
    %v1521 = vld [vmem:[%s11 + $0x18] sm:$0xf]
    %v1522 = vld [vmem:[%s11 + $0x1c] sm:$0xf]
    %v1523 = vld [vmem:[%s12] sm:$0x1]
    %v1525 = vlaneseq
    %v1526 = vshrl.u32 %v1525, 7
    %v1527 = vsub.s32 0, %v1526
    %v1528 = vrot.slane %v1523, %v1527
    %v1538 = vunpack.c.l.b16 %v1515
    %v1539 = vunpack.c.l.b16 %v1516
    %v1540 = vunpack.c.l.b16 %v1517
    %v1541 = vunpack.c.l.b16 %v1518
    %v1542 = vunpack.c.l.b16 %v1519
    %v1543 = vunpack.c.l.b16 %v1520
    %v1544 = vunpack.c.l.b16 %v1521
    %v1545 = vunpack.c.l.b16 %v1522
    %v1546 = vpack.c.b16 %v1539, %v1538
    %v1547 = vpack.c.b16 %v1541, %v1540
    %v1548 = vpack.c.b16 %v1543, %v1542
    %v1549 = vpack.c.b16 %v1545, %v1544
    %v1555 = vsel %vm225, %v1513, 0
    %v1558 = vsel %vm225, %v1514, 0
    %1560 = vmatprep.subr.bf16.mxu0 0
    %1561 = vmatpush1.bf16.msra.mxu0 %v1546
    %1562 = vmatprep.subr.bf16.mxu0 0
    %1563 = vmatpush1.bf16.msra.mxu0 %v1547
    %1564 = vmatprep.subr.bf16.mxu0 0
    %1565 = vmatpush1.bf16.msra.mxu0 %v1548
    %1566 = vmatprep.subr.bf16.mxu0 0
    %1567 = vmatpush1.bf16.msra.mxu0 %v1549
    %1568 = vmatprep.subr.bf16.mxu0 0
    %1569 = vmatpush1.bf16.msra.mxu0 0
    %1570 = vmatprep.subr.bf16.mxu0 0
    %1571 = vmatpush1.bf16.msra.mxu0 0
    %1572 = vmatprep.subr.bf16.mxu0 0
    %1573 = vmatpush1.bf16.msra.mxu0 0
    %1574 = vmatprep.subr.bf16.mxu0 0
    %1575 = vmatpush1.bf16.msra.mxu0 0
    %1576 = vmatprep.subr.bf16.mxu0 0
    %1577 = vmatpush1.bf16.msra.mxu0 0
    %1578 = vmatprep.subr.bf16.mxu0 0
    %1579 = vmatpush1.bf16.msra.mxu0 0
    %1580 = vmatprep.subr.bf16.mxu0 0
    %1581 = vmatpush1.bf16.msra.mxu0 0
    %1582 = vmatprep.subr.bf16.mxu0 0
    %1583 = vmatpush1.bf16.msra.mxu0 0
    %1584 = vmatprep.subr.bf16.mxu0 0
    %1585 = vmatpush1.bf16.msra.mxu0 0
    %1586 = vmatprep.subr.bf16.mxu0 0
    %1587 = vmatpush1.bf16.msra.mxu0 0
    %1588 = vmatprep.subr.bf16.mxu0 0
    %1589 = vmatpush1.bf16.msra.mxu0 0
    %1590 = vmatprep.subr.bf16.mxu0 0
    %1591 = vmatpush1.bf16.msra.mxu0 0
    %1592 = vmatprep.mubr.bf16.mxu0 0
    %1593 = vmatmul.mubr.bf16.gmra.mrb[0].mxu0 %v1555
    %v1594 = vpop.f32.mrb[0].mxu0
    %v1595 = vadd.f32 %v1528, %v1594
    %v1596 = vpop.f32.mrb[0].mxu0
    %v1597 = vpop.f32.mrb[0].mxu0
    %v1598 = vadd.f32 %v1528, %v1597
    %v1599 = vpop.f32.mrb[0].mxu0
    %1600 = vmatprep.mubr.bf16.mxu0 0
    %1601 = vmatmul.mubr.bf16.gmra.mrb[0].mxu0 %v1558
    %v1602 = vpop.f32.mrb[0].mxu0
    %v1603 = vadd.f32 %v1528, %v1602
    %v1604 = vpop.f32.mrb[0].mxu0
    %v1605 = vpop.f32.mrb[0].mxu0
    %v1606 = vadd.f32 %v1528, %v1605
    %v1607 = vpop.f32.mrb[0].mxu0
    %1608 = vdwg.mxu0
    %v1609 = vadd.f32 %v1509, %v1595
    %v1610 = vadd.f32 %v1510, %v1598
    %v1611 = vadd.f32 %v1511, %v1603
    %v1612 = vadd.f32 %v1512, %v1606
    %1613 = vst [vmem:[#allocation11] sm:$0xff] %v1609
    %1614 = vst [vmem:[#allocation11 + $0x8] sm:$0xff] %v1610
    %1615 = vst [vmem:[#allocation11 + $0x10] sm:$0xff] %v1611
    %1616 = vst [vmem:[#allocation11 + $0x18] sm:$0xff] %v1612
    // Predicated region
    $region74: #{tpu_custom_call.1} parent=1 // pred_check
      _
    $region75: #{tpu_custom_call.1} parent=1 // pred_check_branch
      %1618 = sbr.rel (0) target = $region77
    $region76: #{tpu_custom_call.1} parent=1 // pred_region
      %s1620 = ssub.s32 512, 512
      %1621 = vsyncadd [#allocation4], %s1620
      %s1622 = sshll.u32 [#allocation11], 4
      %s1623 = int_to_ptr.vmem [resolvable:$true] %s1622
      %1628 = dma.vmem_to_hbm [thread:$0]  %s1623, 512, %s13, [#allocation4], 128, 128, 8
    $region77: #{tpu_custom_call.1} parent=1 // pred_fallthru
      _
    // Predicated region
    $region78: #{tpu_custom_call.1} parent=1 // pred_check
      _
    $region79: #{tpu_custom_call.1} parent=1 // pred_check_branch
      %1630 = sbr.rel (0) target = $region81
    $region80: #{tpu_custom_call.1} parent=1 // pred_region
      %1631 = dma.done [#allocation4], 512
    $region81: #{tpu_custom_call.1} parent=1 // pred_fallthru
      _
    %1632 = vsyncpa [#allocation3], 1
    %1633 = vsyncpa [#allocation6], 1
    %1634 = vsyncpa [#allocation9], 1
    %1635 = vsyncpa [#allocation4], 1

</llo_original>
